<compile_context>
chip_gen: v6e
topology: v6e:2x2x1
jax: 0.10.0
libtpu: 0.0.40
codegen_flags: <defaults>
</compile_context>

<pallas_src>
import functools
import math

import jax
import jax.numpy as jnp
from jax.experimental import pallas as pl
from jax.experimental.pallas import tpu as pltpu


def _round_up(x, m):
    return (x + m - 1) // m * m


def _chip_info():
    """Best-effort (vmem_capacity_bytes, num_tensorcores) for the local chip."""
    kind = ""
    try:
        kind = jax.devices()[0].device_kind.lower()
    except Exception:
        pass
    multi_tc = any(t in kind for t in ("v7", "v4", "v5p"))
    vmem_cap = (64 << 20) if "v7" in kind else (128 << 20)
    try:
        cap = int(getattr(pltpu.get_tpu_info(), "vmem_capacity_bytes", 0))
        if cap > 0:
            vmem_cap = cap
    except Exception:
        pass
    vmem_cap = min(max(vmem_cap, 16 << 20), 128 << 20)
    num_tc = 2 if multi_tc else 1
    return vmem_cap, num_tc


def _lorentz_kernel(u_ref, v_ref, o_ref, acc_uv, acc_uu, acc_vv, *,
                    beta, groups, seg, last_valid_cols):
    # u_ref, v_ref: (tm, lanes) tiles in VMEM.
    # o_ref: (1, groups, tm) lane-major output block.
    # acc_*: (groups, tm) f32 accumulators, live across the D-chunk axis.
    k = pl.program_id(1)
    nk = pl.num_programs(1)

    @pl.when(k == 0)
    def _init():
        acc_uv[...] = jnp.zeros_like(acc_uv)
        acc_uu[...] = jnp.zeros_like(acc_uu)
        acc_vv[...] = jnp.zeros_like(acc_vv)

    # Upcast before multiplying so bf16 inputs don't lose bits in the
    # products (free VPU casts in this memory-bound regime; no-op for f32).
    u = u_ref[...].astype(jnp.float32)
    v = v_ref[...].astype(jnp.float32)
    tm, lanes = u.shape

    if last_valid_cols < lanes:
        # Ragged last D-chunk: zero the out-of-range columns so unspecified
        # padding data cannot contaminate the reduction.
        col = jax.lax.broadcasted_iota(jnp.int32, (tm, lanes), 1)
        limit = jnp.where(k == nk - 1, last_valid_cols, lanes)
        keep = col < limit
        u = jnp.where(keep, u, 0.0)
        v = jnp.where(keep, v, 0.0)

    # 0/1 block-structured LHS: result row j sums lanes [j*seg, (j+1)*seg),
    # i.e. the features of interleaved original row (r*groups + j).
    # For the generic layout groups == 1 and this is simply ones(1, lanes).
    lane_id = jax.lax.broadcasted_iota(jnp.int32, (groups, lanes), 1)
    grp_id = jax.lax.broadcasted_iota(jnp.int32, (groups, lanes), 0)
    lo = grp_id * seg
    lhs = ((lane_id >= lo) & (lane_id < lo + seg)).astype(jnp.float32)

    dn = (((1,), (1,)), ((), ()))  # contract the last dims of both operands

    def rowsum(x):
        # (groups, lanes) @ (tm, lanes)^T -> (groups, tm): lane-major result
        # straight off the MXU (no cross-lane relayout), f32 accumulation.
        return jax.lax.dot_general(
            lhs, x, dn,
            precision=jax.lax.Precision.HIGHEST,
            preferred_element_type=jnp.float32)

    acc_uv[...] += rowsum(u * v)
    acc_uu[...] += rowsum(u * u)
    acc_vv[...] += rowsum(v * v)

    @pl.when(k == nk - 1)
    def _finish():
        # Separate sqrts (matches the reference; avoids overflow of the fused
        # product for extreme norms). Both EUP pushes are free under the DMA
        # roofline.
        s = jnp.sqrt(acc_uu[...] + beta) * jnp.sqrt(acc_vv[...] + beta)
        res = -2.0 * beta - 2.0 * (acc_uv[...] - s)
        o_ref[...] = res.reshape(o_ref.shape).astype(o_ref.dtype)


def lorentzian_distance(u, v, *, radius=1.0, tile_rows=None):
    """Pallas implementation of LorentzianDistance.forward.

    u, v: identically shaped arrays (..., D). Returns float32 array (...,).
    """
    assert u.shape == v.shape, (u.shape, v.shape)
    beta = float(radius) ** 2  # reference never defines self.beta; use radius**2

    lead_shape = u.shape[:-1]
    D = u.shape[-1]
    M = math.prod(lead_shape) if lead_shape else 1
    itemsize = jnp.dtype(u.dtype).itemsize

    # ---- layout: lane-dense packing for small D ---------------------------
    packed = (D < 128) and (128 % D == 0) and (M > 0) and (M % (128 // D) == 0)
    if packed:
        groups = 128 // D          # original rows per 128-lane reshaped row
        rows = M // groups         # rows of the lane-dense reshaped arrays
        lanes = 128
        seg = D
        grid_k = 1
        last_valid = lanes
        u2 = u.reshape(rows, lanes)   # contiguous metadata reshape, no copy
        v2 = v.reshape(rows, lanes)
    else:
        groups = 1
        rows = M
        if D > 4096:
            # Split very large D over an 'arbitrary' reduction axis so the
            # row tile stays large and the output stays lane-dense.
            lanes = 2048                       # multiple of 128
            grid_k = pl.cdiv(D, lanes)
            last_valid = D - (grid_k - 1) * lanes
        else:
            lanes = D                          # full-dim block (no masking)
            grid_k = 1
            last_valid = D
        seg = lanes
        u2 = u.reshape(rows, D)
        v2 = v.reshape(rows, D)

    # ---- VMEM-aware row-tile selection -------------------------------------
    vmem_cap, num_tc = _chip_info()
    lanes_pad = _round_up(lanes, 128)
    # Bytes of VMEM per tile row: double-buffered inputs + f32 product temps
    # (+ f32 upcasts of u, v for sub-32-bit inputs).
    per_row = 2 * 2 * lanes_pad * itemsize + 3 * lanes_pad * 4
    if itemsize < 4:
        per_row += 2 * lanes_pad * 4

    budget = int(0.40 * vmem_cap)              # inputs + temporaries budget
    sublane = {4: 8, 2: 16, 1: 32}.get(itemsize, 8)
    row_align = 128 if rows >= 128 else sublane

    tm = max(row_align, (budget // per_row) // row_align * row_align)
    if tile_rows is not None:
        tm = min(tm, max(row_align, _round_up(int(tile_rows), row_align)))
    tm = min(tm, _round_up(max(rows, 1), row_align))

    # Multi-TensorCore parts (v7x): keep the parallel row grid balanced.
    if num_tc > 1 and rows > row_align:
        tm = min(tm, _round_up(pl.cdiv(rows, num_tc), row_align))
        gm = _round_up(pl.cdiv(rows, tm), num_tc)
        tm = _round_up(pl.cdiv(rows, gm), row_align)

    if tm >= rows:
        tm = rows                               # single full-extent row block
    grid_m = pl.cdiv(rows, tm)

    # ---- accurate VMEM footprint for the scoped limit ----------------------
    tm_pad = _round_up(tm, 128)
    in_bytes = 2 * 2 * tm * lanes_pad * itemsize
    tmp_bytes = 3 * tm * lanes_pad * 4 + (2 * tm * lanes_pad * 4 if itemsize < 4 else 0)
    acc_bytes = 3 * _round_up(groups, 8) * tm_pad * 4
    out_bytes = 2 * _round_up(groups, 8) * tm_pad * 4
    vmem_need = in_bytes + tmp_bytes + acc_bytes + out_bytes + (2 << 20)  # + Mosaic scratch margin
    vmem_ceiling = (40 << 20) if vmem_cap <= (64 << 20) else (96 << 20)
    vmem_limit = int(min(max(vmem_need, 32 << 20), vmem_ceiling))

    out_dtype = jnp.float32
    kernel = functools.partial(
        _lorentz_kernel, beta=beta, groups=groups, seg=seg,
        last_valid_cols=last_valid)

    out = pl.pallas_call(
        kernel,
        out_shape=jax.ShapeDtypeStruct((grid_m, groups, tm), out_dtype),
        grid_spec=pltpu.PrefetchScalarGridSpec(
            num_scalar_prefetch=0,
            grid=(grid_m, grid_k),
            in_specs=[
                pl.BlockSpec((tm, lanes), lambda i, k: (i, k)),
                pl.BlockSpec((tm, lanes), lambda i, k: (i, k)),
            ],
            out_specs=pl.BlockSpec((1, groups, tm), lambda i, k: (i, 0, 0)),
            scratch_shapes=[
                pltpu.VMEM((groups, tm), jnp.float32),   # acc <u,v>
                pltpu.VMEM((groups, tm), jnp.float32),   # acc <u,u>
                pltpu.VMEM((groups, tm), jnp.float32),   # acc <v,v>
            ],
        ),
        compiler_params=pltpu.CompilerParams(
            dimension_semantics=("parallel", "arbitrary"),
            vmem_limit_bytes=vmem_limit,
        ),
        cost_estimate=pl.CostEstimate(
            flops=9 * M * D,
            transcendentals=2 * M,
            bytes_accessed=2 * M * D * itemsize + M * 4,
        ),
    )(u2, v2)

    # (grid_m, groups, tm) -> (grid_m, tm, groups) -> flat original-row order;
    # drop the unspecified tail rows (raw padded output is never exposed).
    flat = jnp.transpose(out, (0, 2, 1)).reshape(-1)[:M]
    return flat.reshape(lead_shape)


def _reference(u, v, beta=1.0):
    u = u.astype(jnp.float32)
    v = v.astype(jnp.float32)
    u0 = jnp.sqrt(jnp.sum(u * u, axis=-1, keepdims=True) + beta)
    v0 = -jnp.sqrt(jnp.sum(v * v, axis=-1, keepdims=True) + beta)
    uc = jnp.concatenate((u, u0), axis=-1)
    vc = jnp.concatenate((v, v0), axis=-1)
    return -2.0 * beta - 2.0 * jnp.sum(uc * vc, axis=-1)


if __name__ == "__main__":
    key = jax.random.PRNGKey(0)
    k_u, k_v, k_u2, k_v2 = jax.random.split(key, 4)

    # Small shapes consistent with an embedding-distance module:
    # batch=2, seq=8, hidden=32.
    B, N, D = 2, 8, 32
    u = jax.random.normal(k_u, (B, N, D), dtype=jnp.float32) * 0.1
    v = jax.random.normal(k_v, (B, N, D), dtype=jnp.float32) * 0.1

    out = jax.block_until_ready(lorentzian_distance(u, v, radius=1.0))
    ref = _reference(u, v, beta=1.0)
    assert out.shape == (B, N), out.shape
    err = float(jnp.max(jnp.abs(out - ref)))
    assert err < 1e-3, ("mismatch (packed path)", err)

    # Also exercise the generic fallback layout (D does not divide 128).
    D2 = 40
    u_g = jax.random.normal(k_u2, (B, N, D2), dtype=jnp.float32) * 0.1
    v_g = jax.random.normal(k_v2, (B, N, D2), dtype=jnp.float32) * 0.1
    out_g = jax.block_until_ready(lorentzian_distance(u_g, v_g, radius=1.0))
    ref_g = _reference(u_g, v_g, beta=1.0)
    err_g = float(jnp.max(jnp.abs(out_g - ref_g)))
    assert err_g < 1e-3, ("mismatch (generic path)", err_g)

    print("KERNEL_OK")
</pallas_src>

<mosaic_0001>
module attributes {stable_mosaic.version = 11 : i64} {
  func.func @_lorentz_kernel(%arg0: i32, %arg1: i32, %arg2: memref<4x128xf32, #tpu.memory_space<vmem>>, %arg3: memref<4x128xf32, #tpu.memory_space<vmem>>, %arg4: memref<1x4x4xf32, #tpu.memory_space<vmem>>, %arg5: memref<4x4xf32, #tpu.memory_space<vmem>>, %arg6: memref<4x4xf32, #tpu.memory_space<vmem>>, %arg7: memref<4x4xf32, #tpu.memory_space<vmem>>) attributes {dimension_semantics = [#tpu.dimension_semantics<parallel>, #tpu.dimension_semantics<arbitrary>], iteration_bounds = array<i64: 1, 1>, scalar_prefetch = 0 : i64, scratch_operands = 3 : i64, tpu.core_type = #tpu.core_type<tc>, window_params = [{transform_indices = @transform_0, window_bounds = array<i64: 4, 128>}, {transform_indices = @transform_1, window_bounds = array<i64: 4, 128>}, {transform_indices = @transform_2, window_bounds = array<i64: 1, 4, 4>}]} {
    %c0_i32 = arith.constant 0 : i32
    %0 = arith.cmpi eq, %arg1, %c0_i32 : i32
    %1 = arith.extui %0 : i1 to i32
    %c0_i32_0 = arith.constant 0 : i32
    %2 = arith.cmpi ne, %1, %c0_i32_0 : i32
    scf.if %2 {
      %cst_21 = arith.constant 0.000000e+00 : f32
      %34 = vector.broadcast %cst_21 : f32 to vector<4x4xf32>
      %c0_22 = arith.constant 0 : index
      %c0_23 = arith.constant 0 : index
      %35 = vector.load %arg5[%c0_22, %c0_23] : memref<4x4xf32, #tpu.memory_space<vmem>>, vector<4x4xf32>
      tpu.vector_store %arg5[%c0_22, %c0_23], %34 {strides = array<i32>} : memref<4x4xf32, #tpu.memory_space<vmem>>, vector<4x4xf32>,
      %cst_24 = arith.constant 0.000000e+00 : f32
      %36 = vector.broadcast %cst_24 : f32 to vector<4x4xf32>
      %c0_25 = arith.constant 0 : index
      %c0_26 = arith.constant 0 : index
      %37 = vector.load %arg6[%c0_25, %c0_26] : memref<4x4xf32, #tpu.memory_space<vmem>>, vector<4x4xf32>
      tpu.vector_store %arg6[%c0_25, %c0_26], %36 {strides = array<i32>} : memref<4x4xf32, #tpu.memory_space<vmem>>, vector<4x4xf32>,
      %cst_27 = arith.constant 0.000000e+00 : f32
      %38 = vector.broadcast %cst_27 : f32 to vector<4x4xf32>
      %c0_28 = arith.constant 0 : index
      %c0_29 = arith.constant 0 : index
      %39 = vector.load %arg7[%c0_28, %c0_29] : memref<4x4xf32, #tpu.memory_space<vmem>>, vector<4x4xf32>
      tpu.vector_store %arg7[%c0_28, %c0_29], %38 {strides = array<i32>} : memref<4x4xf32, #tpu.memory_space<vmem>>, vector<4x4xf32>,
    } else {
    }
    %c0 = arith.constant 0 : index
    %c0_1 = arith.constant 0 : index
    %3 = vector.load %arg2[%c0, %c0_1] : memref<4x128xf32, #tpu.memory_space<vmem>>, vector<4x128xf32>
    %c0_2 = arith.constant 0 : index
    %c0_3 = arith.constant 0 : index
    %4 = vector.load %arg3[%c0_2, %c0_3] : memref<4x128xf32, #tpu.memory_space<vmem>>, vector<4x128xf32>
    %5 = tpu.iota {dimensions = array<i32: 1>} : vector<4x128xi32>
    %6 = tpu.iota {dimensions = array<i32: 0>} : vector<4x128xi32>
    %c32_i32 = arith.constant 32 : i32
    %7 = vector.broadcast %c32_i32 : i32 to vector<4x128xi32>
    %8 = arith.muli %6, %7 : vector<4x128xi32>
    %9 = arith.cmpi sge, %5, %8 : vector<4x128xi32>
    %c32_i32_4 = arith.constant 32 : i32
    %10 = vector.broadcast %c32_i32_4 : i32 to vector<4x128xi32>
    %11 = arith.addi %8, %10 : vector<4x128xi32>
    %12 = arith.cmpi slt, %5, %11 : vector<4x128xi32>
    %13 = arith.andi %9, %12 : vector<4x128xi1>
    %14 = arith.extui %13 : vector<4x128xi1> to vector<4x128xi32>
    %15 = arith.sitofp %14 : vector<4x128xi32> to vector<4x128xf32>
    %c0_5 = arith.constant 0 : index
    %c0_6 = arith.constant 0 : index
    %16 = vector.load %arg5[%c0_5, %c0_6] : memref<4x4xf32, #tpu.memory_space<vmem>>, vector<4x4xf32>
    %17 = arith.mulf %3, %4 : vector<4x128xf32>
    %cst = arith.constant dense<0.000000e+00> : vector<4x4xf32>
    %18 = tpu.matmul %15, %17, %cst {dimension_numbers = #tpu.dot_dimension_numbers<[1], [1], [0], [0], [0, 0, 1, 0], [], []>, precision = #tpu.contract_precision<fp32>} : vector<4x128xf32>, vector<4x128xf32>, vector<4x4xf32> -> vector<4x4xf32>
    %19 = arith.addf %16, %18 : vector<4x4xf32>
    %c0_7 = arith.constant 0 : index
    %c0_8 = arith.constant 0 : index
    %20 = vector.load %arg5[%c0_7, %c0_8] : memref<4x4xf32, #tpu.memory_space<vmem>>, vector<4x4xf32>
    tpu.vector_store %arg5[%c0_7, %c0_8], %19 {strides = array<i32>} : memref<4x4xf32, #tpu.memory_space<vmem>>, vector<4x4xf32>,
    %c0_9 = arith.constant 0 : index
    %c0_10 = arith.constant 0 : index
    %21 = vector.load %arg6[%c0_9, %c0_10] : memref<4x4xf32, #tpu.memory_space<vmem>>, vector<4x4xf32>
    %22 = arith.mulf %3, %3 : vector<4x128xf32>
    %cst_11 = arith.constant dense<0.000000e+00> : vector<4x4xf32>
    %23 = tpu.matmul %15, %22, %cst_11 {dimension_numbers = #tpu.dot_dimension_numbers<[1], [1], [0], [0], [0, 0, 1, 0], [], []>, precision = #tpu.contract_precision<fp32>} : vector<4x128xf32>, vector<4x128xf32>, vector<4x4xf32> -> vector<4x4xf32>
    %24 = arith.addf %21, %23 : vector<4x4xf32>
    %c0_12 = arith.constant 0 : index
    %c0_13 = arith.constant 0 : index
    %25 = vector.load %arg6[%c0_12, %c0_13] : memref<4x4xf32, #tpu.memory_space<vmem>>, vector<4x4xf32>
    tpu.vector_store %arg6[%c0_12, %c0_13], %24 {strides = array<i32>} : memref<4x4xf32, #tpu.memory_space<vmem>>, vector<4x4xf32>,
    %c0_14 = arith.constant 0 : index
    %c0_15 = arith.constant 0 : index
    %26 = vector.load %arg7[%c0_14, %c0_15] : memref<4x4xf32, #tpu.memory_space<vmem>>, vector<4x4xf32>
    %27 = arith.mulf %4, %4 : vector<4x128xf32>
    %cst_16 = arith.constant dense<0.000000e+00> : vector<4x4xf32>
    %28 = tpu.matmul %15, %27, %cst_16 {dimension_numbers = #tpu.dot_dimension_numbers<[1], [1], [0], [0], [0, 0, 1, 0], [], []>, precision = #tpu.contract_precision<fp32>} : vector<4x128xf32>, vector<4x128xf32>, vector<4x4xf32> -> vector<4x4xf32>
    %29 = arith.addf %26, %28 : vector<4x4xf32>
    %c0_17 = arith.constant 0 : index
    %c0_18 = arith.constant 0 : index
    %30 = vector.load %arg7[%c0_17, %c0_18] : memref<4x4xf32, #tpu.memory_space<vmem>>, vector<4x4xf32>
    tpu.vector_store %arg7[%c0_17, %c0_18], %29 {strides = array<i32>} : memref<4x4xf32, #tpu.memory_space<vmem>>, vector<4x4xf32>,
    %c0_i32_19 = arith.constant 0 : i32
    %31 = arith.cmpi eq, %arg1, %c0_i32_19 : i32
    %32 = arith.extui %31 : i1 to i32
    %c0_i32_20 = arith.constant 0 : i32
    %33 = arith.cmpi ne, %32, %c0_i32_20 : i32
    scf.if %33 {
      %c0_21 = arith.constant 0 : index
      %c0_22 = arith.constant 0 : index
      %34 = vector.load %arg6[%c0_21, %c0_22] : memref<4x4xf32, #tpu.memory_space<vmem>>, vector<4x4xf32>
      %cst_23 = arith.constant 1.000000e+00 : f32
      %35 = vector.broadcast %cst_23 : f32 to vector<4x4xf32>
      %36 = arith.addf %34, %35 : vector<4x4xf32>
      %37 = math.sqrt %36 : vector<4x4xf32>
      %c0_24 = arith.constant 0 : index
      %c0_25 = arith.constant 0 : index
      %38 = vector.load %arg7[%c0_24, %c0_25] : memref<4x4xf32, #tpu.memory_space<vmem>>, vector<4x4xf32>
      %cst_26 = arith.constant 1.000000e+00 : f32
      %39 = vector.broadcast %cst_26 : f32 to vector<4x4xf32>
      %40 = arith.addf %38, %39 : vector<4x4xf32>
      %41 = math.sqrt %40 : vector<4x4xf32>
      %42 = arith.mulf %37, %41 : vector<4x4xf32>
      %c0_27 = arith.constant 0 : index
      %c0_28 = arith.constant 0 : index
      %43 = vector.load %arg5[%c0_27, %c0_28] : memref<4x4xf32, #tpu.memory_space<vmem>>, vector<4x4xf32>
      %44 = arith.subf %43, %42 : vector<4x4xf32>
      %cst_29 = arith.constant 2.000000e+00 : f32
      %45 = vector.broadcast %cst_29 : f32 to vector<4x4xf32>
      %46 = arith.mulf %45, %44 : vector<4x4xf32>
      %cst_30 = arith.constant -2.000000e+00 : f32
      %47 = vector.broadcast %cst_30 : f32 to vector<4x4xf32>
      %48 = arith.subf %47, %46 : vector<4x4xf32>
      %49 = vector.shape_cast %48 : vector<4x4xf32> to vector<1x4x4xf32>
      %c0_31 = arith.constant 0 : index
      %c0_32 = arith.constant 0 : index
      %c0_33 = arith.constant 0 : index
      %50 = vector.load %arg4[%c0_31, %c0_32, %c0_33] : memref<1x4x4xf32, #tpu.memory_space<vmem>>, vector<1x4x4xf32>
      tpu.vector_store %arg4[%c0_31, %c0_32, %c0_33], %49 {strides = array<i32>} : memref<1x4x4xf32, #tpu.memory_space<vmem>>, vector<1x4x4xf32>,
    } else {
    }
    return
  }
  func.func @transform_0(%arg0: i32, %arg1: i32) -> (i32, i32) {
    %c0_i32 = arith.constant 0 : i32
    return %arg0, %arg1 : i32, i32
  }
  func.func @transform_1(%arg0: i32, %arg1: i32) -> (i32, i32) {
    %c0_i32 = arith.constant 0 : i32
    return %arg0, %arg1 : i32, i32
  }
  func.func @transform_2(%arg0: i32, %arg1: i32) -> (i32, i32, i32) {
    %c0_i32 = arith.constant 0 : i32
    %c0_i32_0 = arith.constant 0 : i32
    %c0_i32_1 = arith.constant 0 : i32
    return %arg0, %c0_i32, %c0_i32_0 : i32, i32, i32
  }
}

</mosaic_0001>

<llo_original>
// kernel: tpu_custom_call.1
$region0: #{tpu_custom_call.1}
  #allocation0 [shape = 'u32[]', space=smem, size = 0x4, offset = 0x4, fixed_abs, tag = 'smem constant byte address 0x4 - core index']
  #allocation1 [shape = 'u32[144,128]{1,0:T(1,128)}', space=vmem, size = 0x12000, scoped, tag = 'internal scratch']
  #allocation2 [shape = 'f32[4,4]{1,0:T(4,128)}', space=vmem, size = 0x800, scoped, tag = 'scratch operand']
  #allocation3 [shape = 'f32[4,4]{1,0:T(4,128)}', space=vmem, size = 0x800, scoped, tag = 'scratch operand']
  #allocation4 [shape = 'f32[4,4]{1,0:T(4,128)}', space=vmem, size = 0x800, scoped, tag = 'scratch operand']
  %s0 = inlined_call_operand.hbm [shape: f32[4,128], index: 0, kind: input, shape index: {}]
  %s1 = inlined_call_operand.hbm [shape: f32[4,128], index: 1, kind: input, shape index: {}]
  %s2 = inlined_call_operand.hbm [shape: f32[1,4,4], index: 2, kind: output, shape index: {}]
  %s3 = sld [smem:[#allocation0]]
  $region34: #{tpu_custom_call.1} parent=0
    _
  %s5 = ssub.s32 1, %s3
  %s6 = scalar_select 0, %s5, %s3
  $region1: #{tpu_custom_call.1} parent=0
    #allocation5 [shape = 'u8[2048]{0}', space=vmem, size = 0x800, scoped, tag = 'input window, operand 0, single buffered']
    #allocation6 [shape = 's32[1]{0}', space=sflag, size = 0x4, scoped, tag = 'scoped memory for tpu_custom_call.1']
    #allocation7 [shape = 's32[1]{0}', space=sflag, size = 0x4, scoped, tag = 'scoped memory for tpu_custom_call.1']
    #allocation8 [shape = 'u8[2048]{0}', space=vmem, size = 0x800, scoped, tag = 'input window, operand 1, single buffered']
    #allocation9 [shape = 's32[1]{0}', space=sflag, size = 0x4, scoped, tag = 'scoped memory for tpu_custom_call.1']
    #allocation10 [shape = 'u8[2048]{0}', space=vmem, size = 0x800, scoped, tag = 'output window, operand 0, single buffered']
    %7 = vsyncpa [#allocation6], 0
    %8 = vsyncpa [#allocation9], 0
    %9 = vsyncpa [#allocation7], 0
    // Predicated region
    $region2: #{tpu_custom_call.1} parent=1 // pred_check
      _
    $region3: #{tpu_custom_call.1} parent=1 // pred_check_branch
      %11 = sbr.rel (0) target = $region5
    $region4: #{tpu_custom_call.1} parent=1 // pred_region
      %s13 = ssub.s32 64, 64
      %14 = vsyncadd [#allocation6], %s13
      %s16 = sshll.u32 [#allocation5], 4
      %s17 = int_to_ptr.vmem [resolvable:$true] %s16
      %19 = dma.hbm_to_vmem [thread:$0]  %s0, 64, %s17, [#allocation6]
    $region5: #{tpu_custom_call.1} parent=1 // pred_fallthru
      _
    // Predicated region
    $region6: #{tpu_custom_call.1} parent=1 // pred_check
      _
    $region7: #{tpu_custom_call.1} parent=1 // pred_check_branch
      %21 = sbr.rel (0) target = $region9
    $region8: #{tpu_custom_call.1} parent=1 // pred_region
      %s23 = ssub.s32 64, 64
      %24 = vsyncadd [#allocation9], %s23
      %s26 = sshll.u32 [#allocation8], 4
      %s27 = int_to_ptr.vmem [resolvable:$true] %s26
      %29 = dma.hbm_to_vmem [thread:$0]  %s1, 64, %s27, [#allocation9]
    $region9: #{tpu_custom_call.1} parent=1 // pred_fallthru
      _
    // Predicated region
    $region10: #{tpu_custom_call.1} parent=1 // pred_check
      _
    $region11: #{tpu_custom_call.1} parent=1 // pred_check_branch
      %31 = sbr.rel (0) target = $region13
    $region12: #{tpu_custom_call.1} parent=1 // pred_region
      %32 = dma.done [#allocation6], 64
    $region13: #{tpu_custom_call.1} parent=1 // pred_fallthru
      _
    // Predicated region
    $region14: #{tpu_custom_call.1} parent=1 // pred_check
      _
    $region15: #{tpu_custom_call.1} parent=1 // pred_check_branch
      %34 = sbr.rel (0) target = $region17
    $region16: #{tpu_custom_call.1} parent=1 // pred_region
      %35 = dma.done [#allocation9], 64
    $region17: #{tpu_custom_call.1} parent=1 // pred_fallthru
      _
    %p36 = scmp.eq.s32.totalorder 0, 0
    // Predicated region
    $region18: #{tpu_custom_call.1} parent=1 // pred_check
      %p37 = pneg %p36
    $region19: #{tpu_custom_call.1} parent=1 // pred_check_branch
      %39 = sbr.rel (%p37) target = $region21
    $region20: #{tpu_custom_call.1} parent=1 // pred_region
      %vm40 = vcmask 27648
      %41 = vst.msk [vmem:[#allocation2] sm:$0xf] %vm40, 0.0
      %42 = vst.msk [vmem:[#allocation3] sm:$0xf] %vm40, 0.0
      %43 = vst.msk [vmem:[#allocation4] sm:$0xf] %vm40, 0.0
    $region21: #{tpu_custom_call.1} parent=1 // pred_fallthru
      _
    %v44 = vld [vmem:[#allocation5] sm:$0xf]
    %v45 = vld [vmem:[#allocation8] sm:$0xf]
    %v46 = vlaneseq
    %v47 = vand.u32 %v46, 127
    %v48 = vlaneseq
    %v49 = vshrl.u32 %v48, 7
    %v50 = vmul.u32 %v49, 32
    %vm51 = vcmp.ge.s32.totalorder %v47, %v50
    %v52 = vadd.s32 %v50, 32
    %vm53 = vcmp.lt.s32.totalorder %v47, %v52
    %vm54 = vmand %vm51, %vm53
    %v55 = vsel %vm54, 1, 0
    %v56 = vcvt.s32.f32 %v55
    %v57 = vld [vmem:[#allocation2] sm:$0xf]
    %v58 = vmul.f32 %v44, %v45
    %59 = vmatprep.subr.mxu0 0.0
    %60 = vmatpush1.xpose.msra.mxu0 0.0
    %61 = vmatprep.subr.mxu0 0.0
    %62 = vmatpush1.xpose.msra.mxu0 0.0
    %63 = vmatprep.subr.mxu0 0.0
    %64 = vmatpush1.xpose.msra.mxu0 0.0
    %65 = vmatprep.subr.mxu0 0.0
    %66 = vmatpush1.xpose.msra.mxu0 0.0
    %67 = vmatprep.subr.mxu0 0.0
    %68 = vmatpush1.xpose.msra.mxu0 0.0
    %69 = vmatprep.subr.mxu0 0.0
    %70 = vmatpush1.xpose.msra.mxu0 0.0
    %71 = vmatprep.subr.mxu0 0.0
    %72 = vmatpush1.xpose.msra.mxu0 0.0
    %73 = vmatprep.subr.mxu0 0.0
    %74 = vmatpush1.xpose.msra.mxu0 0.0
    %75 = vmatprep.subr.mxu0 0.0
    %76 = vmatpush1.xpose.msra.mxu0 0.0
    %77 = vmatprep.subr.mxu0 0.0
    %78 = vmatpush1.xpose.msra.mxu0 0.0
    %79 = vmatprep.subr.mxu0 0.0
    %80 = vmatpush1.xpose.msra.mxu0 0.0
    %81 = vmatprep.subr.mxu0 0.0
    %82 = vmatpush1.xpose.msra.mxu0 0.0
    %83 = vmatprep.subr.mxu0 0.0
    %84 = vmatpush1.xpose.msra.mxu0 0.0
    %85 = vmatprep.subr.mxu0 0.0
    %86 = vmatpush1.xpose.msra.mxu0 0.0
    %87 = vmatprep.subr.mxu0 0.0
    %88 = vmatpush1.xpose.msra.mxu0 0.0
    %89 = vmatprep.subr.mxu0 0.0
    %v90 = vand.u32 %v58, 4294901760
    %91 = vmatpush1.xpose.msra.mxu0 %v90
    %92 = vmatprep.subr.mxu0 0.0
    %93 = vmatpush2.xpose.msra.mxu0 0.0
    %94 = vmatprep.subr.mxu0 0.0
    %95 = vmatpush2.xpose.msra.mxu0 0.0
    %96 = vmatprep.subr.mxu0 0.0
    %97 = vmatpush2.xpose.msra.mxu0 0.0
    %98 = vmatprep.subr.mxu0 0.0
    %99 = vmatpush2.xpose.msra.mxu0 0.0
    %100 = vmatprep.subr.mxu0 0.0
    %101 = vmatpush2.xpose.msra.mxu0 0.0
    %102 = vmatprep.subr.mxu0 0.0
    %103 = vmatpush2.xpose.msra.mxu0 0.0
    %104 = vmatprep.subr.mxu0 0.0
    %105 = vmatpush2.xpose.msra.mxu0 0.0
    %106 = vmatprep.subr.mxu0 0.0
    %107 = vmatpush2.xpose.msra.mxu0 0.0
    %108 = vmatprep.subr.mxu0 0.0
    %109 = vmatpush2.xpose.msra.mxu0 0.0
    %110 = vmatprep.subr.mxu0 0.0
    %111 = vmatpush2.xpose.msra.mxu0 0.0
    %112 = vmatprep.subr.mxu0 0.0
    %113 = vmatpush2.xpose.msra.mxu0 0.0
    %114 = vmatprep.subr.mxu0 0.0
    %115 = vmatpush2.xpose.msra.mxu0 0.0
    %116 = vmatprep.subr.mxu0 0.0
    %117 = vmatpush2.xpose.msra.mxu0 0.0
    %118 = vmatprep.subr.mxu0 0.0
    %119 = vmatpush2.xpose.msra.mxu0 0.0
    %120 = vmatprep.subr.mxu0 0.0
    %121 = vmatpush2.xpose.msra.mxu0 0.0
    %122 = vmatprep.subr.mxu0 0.0
    %123 = vmatpush2.xpose.msra.mxu0 0.0
    %124 = vmatprep.mubr.f32.mxu0 0.0
    %v125 = vand.u32 %v56, 4294901760
    %v126 = vsub.f32 %v56, %v125
    %v127 = vand.u32 %v126, 4294901760
    %v128 = vsub.f32 %v126, %v127
    %v129 = vand.u32 %v128, 4294901760
    %130 = vmatmul.mubr.f32.gmra.mxu0 %v129
    %v131 = vpop.f32.mrf.mxu0
    %v132 = vadd.f32 0.0, %v131
    %v133 = vpop.f32.mrf.mxu0
    %134 = vdwg.mxu0
    %135 = vmatprep.subr.mxu0 0.0
    %136 = vmatpush1.xpose.msra.mxu0 0.0
    %137 = vmatprep.subr.mxu0 0.0
    %138 = vmatpush1.xpose.msra.mxu0 0.0
    %139 = vmatprep.subr.mxu0 0.0
    %140 = vmatpush1.xpose.msra.mxu0 0.0
    %141 = vmatprep.subr.mxu0 0.0
    %142 = vmatpush1.xpose.msra.mxu0 0.0
    %143 = vmatprep.subr.mxu0 0.0
    %144 = vmatpush1.xpose.msra.mxu0 0.0
    %145 = vmatprep.subr.mxu0 0.0
    %146 = vmatpush1.xpose.msra.mxu0 0.0
    %147 = vmatprep.subr.mxu0 0.0
    %148 = vmatpush1.xpose.msra.mxu0 0.0
    %149 = vmatprep.subr.mxu0 0.0
    %150 = vmatpush1.xpose.msra.mxu0 0.0
    %151 = vmatprep.subr.mxu0 0.0
    %152 = vmatpush1.xpose.msra.mxu0 0.0
    %153 = vmatprep.subr.mxu0 0.0
    %154 = vmatpush1.xpose.msra.mxu0 0.0
    %155 = vmatprep.subr.mxu0 0.0
    %156 = vmatpush1.xpose.msra.mxu0 0.0
    %157 = vmatprep.subr.mxu0 0.0
    %158 = vmatpush1.xpose.msra.mxu0 0.0
    %159 = vmatprep.subr.mxu0 0.0
    %160 = vmatpush1.xpose.msra.mxu0 0.0
    %161 = vmatprep.subr.mxu0 0.0
    %162 = vmatpush1.xpose.msra.mxu0 0.0
    %163 = vmatprep.subr.mxu0 0.0
    %164 = vmatpush1.xpose.msra.mxu0 0.0
    %165 = vmatprep.subr.mxu0 0.0
    %v166 = vand.u32 %v58, 4294901760
    %v167 = vsub.f32 %v58, %v166
    %v168 = vand.u32 %v167, 4294901760
    %v169 = vsub.f32 %v167, %v168
    %v170 = vand.u32 %v169, 4294901760
    %171 = vmatpush1.xpose.msra.mxu0 %v170
    %172 = vmatprep.subr.mxu0 0.0
    %173 = vmatpush2.xpose.msra.mxu0 0.0
    %174 = vmatprep.subr.mxu0 0.0
    %175 = vmatpush2.xpose.msra.mxu0 0.0
    %176 = vmatprep.subr.mxu0 0.0
    %177 = vmatpush2.xpose.msra.mxu0 0.0
    %178 = vmatprep.subr.mxu0 0.0
    %179 = vmatpush2.xpose.msra.mxu0 0.0
    %180 = vmatprep.subr.mxu0 0.0
    %181 = vmatpush2.xpose.msra.mxu0 0.0
    %182 = vmatprep.subr.mxu0 0.0
    %183 = vmatpush2.xpose.msra.mxu0 0.0
    %184 = vmatprep.subr.mxu0 0.0
    %185 = vmatpush2.xpose.msra.mxu0 0.0
    %186 = vmatprep.subr.mxu0 0.0
    %187 = vmatpush2.xpose.msra.mxu0 0.0
    %188 = vmatprep.subr.mxu0 0.0
    %189 = vmatpush2.xpose.msra.mxu0 0.0
    %190 = vmatprep.subr.mxu0 0.0
    %191 = vmatpush2.xpose.msra.mxu0 0.0
    %192 = vmatprep.subr.mxu0 0.0
    %193 = vmatpush2.xpose.msra.mxu0 0.0
    %194 = vmatprep.subr.mxu0 0.0
    %195 = vmatpush2.xpose.msra.mxu0 0.0
    %196 = vmatprep.subr.mxu0 0.0
    %197 = vmatpush2.xpose.msra.mxu0 0.0
    %198 = vmatprep.subr.mxu0 0.0
    %199 = vmatpush2.xpose.msra.mxu0 0.0
    %200 = vmatprep.subr.mxu0 0.0
    %201 = vmatpush2.xpose.msra.mxu0 0.0
    %202 = vmatprep.subr.mxu0 0.0
    %203 = vmatpush2.xpose.msra.mxu0 0.0
    %204 = vmatprep.mubr.f32.mxu0 0.0
    %v205 = vand.u32 %v56, 4294901760
    %206 = vmatmul.mubr.f32.gmra.mxu0 %v205
    %v207 = vpop.f32.mrf.mxu0
    %v208 = vadd.f32 %v132, %v207
    %v209 = vpop.f32.mrf.mxu0
    %210 = vdwg.mxu0
    %211 = vmatprep.subr.mxu0 0.0
    %212 = vmatpush1.xpose.msra.mxu0 0.0
    %213 = vmatprep.subr.mxu0 0.0
    %214 = vmatpush1.xpose.msra.mxu0 0.0
    %215 = vmatprep.subr.mxu0 0.0
    %216 = vmatpush1.xpose.msra.mxu0 0.0
    %217 = vmatprep.subr.mxu0 0.0
    %218 = vmatpush1.xpose.msra.mxu0 0.0
    %219 = vmatprep.subr.mxu0 0.0
    %220 = vmatpush1.xpose.msra.mxu0 0.0
    %221 = vmatprep.subr.mxu0 0.0
    %222 = vmatpush1.xpose.msra.mxu0 0.0
    %223 = vmatprep.subr.mxu0 0.0
    %224 = vmatpush1.xpose.msra.mxu0 0.0
    %225 = vmatprep.subr.mxu0 0.0
    %226 = vmatpush1.xpose.msra.mxu0 0.0
    %227 = vmatprep.subr.mxu0 0.0
    %228 = vmatpush1.xpose.msra.mxu0 0.0
    %229 = vmatprep.subr.mxu0 0.0
    %230 = vmatpush1.xpose.msra.mxu0 0.0
    %231 = vmatprep.subr.mxu0 0.0
    %232 = vmatpush1.xpose.msra.mxu0 0.0
    %233 = vmatprep.subr.mxu0 0.0
    %234 = vmatpush1.xpose.msra.mxu0 0.0
    %235 = vmatprep.subr.mxu0 0.0
    %236 = vmatpush1.xpose.msra.mxu0 0.0
    %237 = vmatprep.subr.mxu0 0.0
    %238 = vmatpush1.xpose.msra.mxu0 0.0
    %239 = vmatprep.subr.mxu0 0.0
    %240 = vmatpush1.xpose.msra.mxu0 0.0
    %241 = vmatprep.subr.mxu0 0.0
    %v242 = vand.u32 %v58, 4294901760
    %v243 = vsub.f32 %v58, %v242
    %244 = vmatpush1.xpose.msra.mxu0 %v243
    %245 = vmatprep.subr.mxu0 0.0
    %246 = vmatpush2.xpose.msra.mxu0 0.0
    %247 = vmatprep.subr.mxu0 0.0
    %248 = vmatpush2.xpose.msra.mxu0 0.0
    %249 = vmatprep.subr.mxu0 0.0
    %250 = vmatpush2.xpose.msra.mxu0 0.0
    %251 = vmatprep.subr.mxu0 0.0
    %252 = vmatpush2.xpose.msra.mxu0 0.0
    %253 = vmatprep.subr.mxu0 0.0
    %254 = vmatpush2.xpose.msra.mxu0 0.0
    %255 = vmatprep.subr.mxu0 0.0
    %256 = vmatpush2.xpose.msra.mxu0 0.0
    %257 = vmatprep.subr.mxu0 0.0
    %258 = vmatpush2.xpose.msra.mxu0 0.0
    %259 = vmatprep.subr.mxu0 0.0
    %260 = vmatpush2.xpose.msra.mxu0 0.0
    %261 = vmatprep.subr.mxu0 0.0
    %262 = vmatpush2.xpose.msra.mxu0 0.0
    %263 = vmatprep.subr.mxu0 0.0
    %264 = vmatpush2.xpose.msra.mxu0 0.0
    %265 = vmatprep.subr.mxu0 0.0
    %266 = vmatpush2.xpose.msra.mxu0 0.0
    %267 = vmatprep.subr.mxu0 0.0
    %268 = vmatpush2.xpose.msra.mxu0 0.0
    %269 = vmatprep.subr.mxu0 0.0
    %270 = vmatpush2.xpose.msra.mxu0 0.0
    %271 = vmatprep.subr.mxu0 0.0
    %272 = vmatpush2.xpose.msra.mxu0 0.0
    %273 = vmatprep.subr.mxu0 0.0
    %274 = vmatpush2.xpose.msra.mxu0 0.0
    %275 = vmatprep.subr.mxu0 0.0
    %276 = vmatpush2.xpose.msra.mxu0 0.0
    %277 = vmatprep.mubr.f32.mxu0 0.0
    %v278 = vand.u32 %v56, 4294901760
    %v279 = vsub.f32 %v56, %v278
    %280 = vmatmul.mubr.f32.gmra.mxu0 %v279
    %v281 = vpop.f32.mrf.mxu0
    %v282 = vadd.f32 %v208, %v281
    %v283 = vpop.f32.mrf.mxu0
    %284 = vdwg.mxu0
    %285 = vmatprep.subr.mxu0 0.0
    %286 = vmatpush1.xpose.msra.mxu0 0.0
    %287 = vmatprep.subr.mxu0 0.0
    %288 = vmatpush1.xpose.msra.mxu0 0.0
    %289 = vmatprep.subr.mxu0 0.0
    %290 = vmatpush1.xpose.msra.mxu0 0.0
    %291 = vmatprep.subr.mxu0 0.0
    %292 = vmatpush1.xpose.msra.mxu0 0.0
    %293 = vmatprep.subr.mxu0 0.0
    %294 = vmatpush1.xpose.msra.mxu0 0.0
    %295 = vmatprep.subr.mxu0 0.0
    %296 = vmatpush1.xpose.msra.mxu0 0.0
    %297 = vmatprep.subr.mxu0 0.0
    %298 = vmatpush1.xpose.msra.mxu0 0.0
    %299 = vmatprep.subr.mxu0 0.0
    %300 = vmatpush1.xpose.msra.mxu0 0.0
    %301 = vmatprep.subr.mxu0 0.0
    %302 = vmatpush1.xpose.msra.mxu0 0.0
    %303 = vmatprep.subr.mxu0 0.0
    %304 = vmatpush1.xpose.msra.mxu0 0.0
    %305 = vmatprep.subr.mxu0 0.0
    %306 = vmatpush1.xpose.msra.mxu0 0.0
    %307 = vmatprep.subr.mxu0 0.0
    %308 = vmatpush1.xpose.msra.mxu0 0.0
    %309 = vmatprep.subr.mxu0 0.0
    %310 = vmatpush1.xpose.msra.mxu0 0.0
    %311 = vmatprep.subr.mxu0 0.0
    %312 = vmatpush1.xpose.msra.mxu0 0.0
    %313 = vmatprep.subr.mxu0 0.0
    %314 = vmatpush1.xpose.msra.mxu0 0.0
    %315 = vmatprep.subr.mxu0 0.0
    %v316 = vand.u32 %v58, 4294901760
    %317 = vmatpush1.xpose.msra.mxu0 %v316
    %318 = vmatprep.subr.mxu0 0.0
    %319 = vmatpush2.xpose.msra.mxu0 0.0
    %320 = vmatprep.subr.mxu0 0.0
    %321 = vmatpush2.xpose.msra.mxu0 0.0
    %322 = vmatprep.subr.mxu0 0.0
    %323 = vmatpush2.xpose.msra.mxu0 0.0
    %324 = vmatprep.subr.mxu0 0.0
    %325 = vmatpush2.xpose.msra.mxu0 0.0
    %326 = vmatprep.subr.mxu0 0.0
    %327 = vmatpush2.xpose.msra.mxu0 0.0
    %328 = vmatprep.subr.mxu0 0.0
    %329 = vmatpush2.xpose.msra.mxu0 0.0
    %330 = vmatprep.subr.mxu0 0.0
    %331 = vmatpush2.xpose.msra.mxu0 0.0
    %332 = vmatprep.subr.mxu0 0.0
    %333 = vmatpush2.xpose.msra.mxu0 0.0
    %334 = vmatprep.subr.mxu0 0.0
    %335 = vmatpush2.xpose.msra.mxu0 0.0
    %336 = vmatprep.subr.mxu0 0.0
    %337 = vmatpush2.xpose.msra.mxu0 0.0
    %338 = vmatprep.subr.mxu0 0.0
    %339 = vmatpush2.xpose.msra.mxu0 0.0
    %340 = vmatprep.subr.mxu0 0.0
    %341 = vmatpush2.xpose.msra.mxu0 0.0
    %342 = vmatprep.subr.mxu0 0.0
    %343 = vmatpush2.xpose.msra.mxu0 0.0
    %344 = vmatprep.subr.mxu0 0.0
    %345 = vmatpush2.xpose.msra.mxu0 0.0
    %346 = vmatprep.subr.mxu0 0.0
    %347 = vmatpush2.xpose.msra.mxu0 0.0
    %348 = vmatprep.subr.mxu0 0.0
    %349 = vmatpush2.xpose.msra.mxu0 0.0
    %350 = vmatprep.mubr.f32.mxu0 0.0
    %v351 = vand.u32 %v56, 4294901760
    %v352 = vsub.f32 %v56, %v351
    %v353 = vand.u32 %v352, 4294901760
    %354 = vmatmul.mubr.f32.gmra.mxu0 %v353
    %v355 = vpop.f32.mrf.mxu0
    %v356 = vadd.f32 %v282, %v355
    %v357 = vpop.f32.mrf.mxu0
    %358 = vdwg.mxu0
    %359 = vmatprep.subr.mxu0 0.0
    %360 = vmatpush1.xpose.msra.mxu0 0.0
    %361 = vmatprep.subr.mxu0 0.0
    %362 = vmatpush1.xpose.msra.mxu0 0.0
    %363 = vmatprep.subr.mxu0 0.0
    %364 = vmatpush1.xpose.msra.mxu0 0.0
    %365 = vmatprep.subr.mxu0 0.0
    %366 = vmatpush1.xpose.msra.mxu0 0.0
    %367 = vmatprep.subr.mxu0 0.0
    %368 = vmatpush1.xpose.msra.mxu0 0.0
    %369 = vmatprep.subr.mxu0 0.0
    %370 = vmatpush1.xpose.msra.mxu0 0.0
    %371 = vmatprep.subr.mxu0 0.0
    %372 = vmatpush1.xpose.msra.mxu0 0.0
    %373 = vmatprep.subr.mxu0 0.0
    %374 = vmatpush1.xpose.msra.mxu0 0.0
    %375 = vmatprep.subr.mxu0 0.0
    %376 = vmatpush1.xpose.msra.mxu0 0.0
    %377 = vmatprep.subr.mxu0 0.0
    %378 = vmatpush1.xpose.msra.mxu0 0.0
    %379 = vmatprep.subr.mxu0 0.0
    %380 = vmatpush1.xpose.msra.mxu0 0.0
    %381 = vmatprep.subr.mxu0 0.0
    %382 = vmatpush1.xpose.msra.mxu0 0.0
    %383 = vmatprep.subr.mxu0 0.0
    %384 = vmatpush1.xpose.msra.mxu0 0.0
    %385 = vmatprep.subr.mxu0 0.0
    %386 = vmatpush1.xpose.msra.mxu0 0.0
    %387 = vmatprep.subr.mxu0 0.0
    %388 = vmatpush1.xpose.msra.mxu0 0.0
    %389 = vmatprep.subr.mxu0 0.0
    %v390 = vand.u32 %v58, 4294901760
    %v391 = vsub.f32 %v58, %v390
    %v392 = vand.u32 %v391, 4294901760
    %393 = vmatpush1.xpose.msra.mxu0 %v392
    %394 = vmatprep.subr.mxu0 0.0
    %395 = vmatpush2.xpose.msra.mxu0 0.0
    %396 = vmatprep.subr.mxu0 0.0
    %397 = vmatpush2.xpose.msra.mxu0 0.0
    %398 = vmatprep.subr.mxu0 0.0
    %399 = vmatpush2.xpose.msra.mxu0 0.0
    %400 = vmatprep.subr.mxu0 0.0
    %401 = vmatpush2.xpose.msra.mxu0 0.0
    %402 = vmatprep.subr.mxu0 0.0
    %403 = vmatpush2.xpose.msra.mxu0 0.0
    %404 = vmatprep.subr.mxu0 0.0
    %405 = vmatpush2.xpose.msra.mxu0 0.0
    %406 = vmatprep.subr.mxu0 0.0
    %407 = vmatpush2.xpose.msra.mxu0 0.0
    %408 = vmatprep.subr.mxu0 0.0
    %409 = vmatpush2.xpose.msra.mxu0 0.0
    %410 = vmatprep.subr.mxu0 0.0
    %411 = vmatpush2.xpose.msra.mxu0 0.0
    %412 = vmatprep.subr.mxu0 0.0
    %413 = vmatpush2.xpose.msra.mxu0 0.0
    %414 = vmatprep.subr.mxu0 0.0
    %415 = vmatpush2.xpose.msra.mxu0 0.0
    %416 = vmatprep.subr.mxu0 0.0
    %417 = vmatpush2.xpose.msra.mxu0 0.0
    %418 = vmatprep.subr.mxu0 0.0
    %419 = vmatpush2.xpose.msra.mxu0 0.0
    %420 = vmatprep.subr.mxu0 0.0
    %421 = vmatpush2.xpose.msra.mxu0 0.0
    %422 = vmatprep.subr.mxu0 0.0
    %423 = vmatpush2.xpose.msra.mxu0 0.0
    %424 = vmatprep.subr.mxu0 0.0
    %425 = vmatpush2.xpose.msra.mxu0 0.0
    %426 = vmatprep.mubr.f32.mxu0 0.0
    %v427 = vand.u32 %v56, 4294901760
    %428 = vmatmul.mubr.f32.gmra.mxu0 %v427
    %v429 = vpop.f32.mrf.mxu0
    %v430 = vadd.f32 %v356, %v429
    %v431 = vpop.f32.mrf.mxu0
    %432 = vdwg.mxu0
    %433 = vmatprep.subr.mxu0 0.0
    %434 = vmatpush1.xpose.msra.mxu0 0.0
    %435 = vmatprep.subr.mxu0 0.0
    %436 = vmatpush1.xpose.msra.mxu0 0.0
    %437 = vmatprep.subr.mxu0 0.0
    %438 = vmatpush1.xpose.msra.mxu0 0.0
    %439 = vmatprep.subr.mxu0 0.0
    %440 = vmatpush1.xpose.msra.mxu0 0.0
    %441 = vmatprep.subr.mxu0 0.0
    %442 = vmatpush1.xpose.msra.mxu0 0.0
    %443 = vmatprep.subr.mxu0 0.0
    %444 = vmatpush1.xpose.msra.mxu0 0.0
    %445 = vmatprep.subr.mxu0 0.0
    %446 = vmatpush1.xpose.msra.mxu0 0.0
    %447 = vmatprep.subr.mxu0 0.0
    %448 = vmatpush1.xpose.msra.mxu0 0.0
    %449 = vmatprep.subr.mxu0 0.0
    %450 = vmatpush1.xpose.msra.mxu0 0.0
    %451 = vmatprep.subr.mxu0 0.0
    %452 = vmatpush1.xpose.msra.mxu0 0.0
    %453 = vmatprep.subr.mxu0 0.0
    %454 = vmatpush1.xpose.msra.mxu0 0.0
    %455 = vmatprep.subr.mxu0 0.0
    %456 = vmatpush1.xpose.msra.mxu0 0.0
    %457 = vmatprep.subr.mxu0 0.0
    %458 = vmatpush1.xpose.msra.mxu0 0.0
    %459 = vmatprep.subr.mxu0 0.0
    %460 = vmatpush1.xpose.msra.mxu0 0.0
    %461 = vmatprep.subr.mxu0 0.0
    %462 = vmatpush1.xpose.msra.mxu0 0.0
    %463 = vmatprep.subr.mxu0 0.0
    %v464 = vand.u32 %v58, 4294901760
    %465 = vmatpush1.xpose.msra.mxu0 %v464
    %466 = vmatprep.subr.mxu0 0.0
    %467 = vmatpush2.xpose.msra.mxu0 0.0
    %468 = vmatprep.subr.mxu0 0.0
    %469 = vmatpush2.xpose.msra.mxu0 0.0
    %470 = vmatprep.subr.mxu0 0.0
    %471 = vmatpush2.xpose.msra.mxu0 0.0
    %472 = vmatprep.subr.mxu0 0.0
    %473 = vmatpush2.xpose.msra.mxu0 0.0
    %474 = vmatprep.subr.mxu0 0.0
    %475 = vmatpush2.xpose.msra.mxu0 0.0
    %476 = vmatprep.subr.mxu0 0.0
    %477 = vmatpush2.xpose.msra.mxu0 0.0
    %478 = vmatprep.subr.mxu0 0.0
    %479 = vmatpush2.xpose.msra.mxu0 0.0
    %480 = vmatprep.subr.mxu0 0.0
    %481 = vmatpush2.xpose.msra.mxu0 0.0
    %482 = vmatprep.subr.mxu0 0.0
    %483 = vmatpush2.xpose.msra.mxu0 0.0
    %484 = vmatprep.subr.mxu0 0.0
    %485 = vmatpush2.xpose.msra.mxu0 0.0
    %486 = vmatprep.subr.mxu0 0.0
    %487 = vmatpush2.xpose.msra.mxu0 0.0
    %488 = vmatprep.subr.mxu0 0.0
    %489 = vmatpush2.xpose.msra.mxu0 0.0
    %490 = vmatprep.subr.mxu0 0.0
    %491 = vmatpush2.xpose.msra.mxu0 0.0
    %492 = vmatprep.subr.mxu0 0.0
    %493 = vmatpush2.xpose.msra.mxu0 0.0
    %494 = vmatprep.subr.mxu0 0.0
    %495 = vmatpush2.xpose.msra.mxu0 0.0
    %496 = vmatprep.subr.mxu0 0.0
    %497 = vmatpush2.xpose.msra.mxu0 0.0
    %498 = vmatprep.mubr.f32.mxu0 0.0
    %v499 = vand.u32 %v56, 4294901760
    %500 = vmatmul.mubr.f32.gmra.mxu0 %v499
    %v501 = vpop.f32.mrf.mxu0
    %v502 = vadd.f32 %v430, %v501
    %v503 = vpop.f32.mrf.mxu0
    %504 = vdwg.mxu0
    %v505 = vadd.f32 %v57, %v502
    %vm506 = vcmask 27648
    %507 = vst.msk [vmem:[#allocation2] sm:$0xf] %vm506, %v505
    %v508 = vld [vmem:[#allocation3] sm:$0xf]
    %v509 = vmul.f32 %v44, %v44
    %510 = vmatprep.subr.mxu0 0.0
    %511 = vmatpush1.xpose.msra.mxu0 0.0
    %512 = vmatprep.subr.mxu0 0.0
    %513 = vmatpush1.xpose.msra.mxu0 0.0
    %514 = vmatprep.subr.mxu0 0.0
    %515 = vmatpush1.xpose.msra.mxu0 0.0
    %516 = vmatprep.subr.mxu0 0.0
    %517 = vmatpush1.xpose.msra.mxu0 0.0
    %518 = vmatprep.subr.mxu0 0.0
    %519 = vmatpush1.xpose.msra.mxu0 0.0
    %520 = vmatprep.subr.mxu0 0.0
    %521 = vmatpush1.xpose.msra.mxu0 0.0
    %522 = vmatprep.subr.mxu0 0.0
    %523 = vmatpush1.xpose.msra.mxu0 0.0
    %524 = vmatprep.subr.mxu0 0.0
    %525 = vmatpush1.xpose.msra.mxu0 0.0
    %526 = vmatprep.subr.mxu0 0.0
    %527 = vmatpush1.xpose.msra.mxu0 0.0
    %528 = vmatprep.subr.mxu0 0.0
    %529 = vmatpush1.xpose.msra.mxu0 0.0
    %530 = vmatprep.subr.mxu0 0.0
    %531 = vmatpush1.xpose.msra.mxu0 0.0
    %532 = vmatprep.subr.mxu0 0.0
    %533 = vmatpush1.xpose.msra.mxu0 0.0
    %534 = vmatprep.subr.mxu0 0.0
    %535 = vmatpush1.xpose.msra.mxu0 0.0
    %536 = vmatprep.subr.mxu0 0.0
    %537 = vmatpush1.xpose.msra.mxu0 0.0
    %538 = vmatprep.subr.mxu0 0.0
    %539 = vmatpush1.xpose.msra.mxu0 0.0
    %540 = vmatprep.subr.mxu0 0.0
    %v541 = vand.u32 %v509, 4294901760
    %542 = vmatpush1.xpose.msra.mxu0 %v541
    %543 = vmatprep.subr.mxu0 0.0
    %544 = vmatpush2.xpose.msra.mxu0 0.0
    %545 = vmatprep.subr.mxu0 0.0
    %546 = vmatpush2.xpose.msra.mxu0 0.0
    %547 = vmatprep.subr.mxu0 0.0
    %548 = vmatpush2.xpose.msra.mxu0 0.0
    %549 = vmatprep.subr.mxu0 0.0
    %550 = vmatpush2.xpose.msra.mxu0 0.0
    %551 = vmatprep.subr.mxu0 0.0
    %552 = vmatpush2.xpose.msra.mxu0 0.0
    %553 = vmatprep.subr.mxu0 0.0
    %554 = vmatpush2.xpose.msra.mxu0 0.0
    %555 = vmatprep.subr.mxu0 0.0
    %556 = vmatpush2.xpose.msra.mxu0 0.0
    %557 = vmatprep.subr.mxu0 0.0
    %558 = vmatpush2.xpose.msra.mxu0 0.0
    %559 = vmatprep.subr.mxu0 0.0
    %560 = vmatpush2.xpose.msra.mxu0 0.0
    %561 = vmatprep.subr.mxu0 0.0
    %562 = vmatpush2.xpose.msra.mxu0 0.0
    %563 = vmatprep.subr.mxu0 0.0
    %564 = vmatpush2.xpose.msra.mxu0 0.0
    %565 = vmatprep.subr.mxu0 0.0
    %566 = vmatpush2.xpose.msra.mxu0 0.0
    %567 = vmatprep.subr.mxu0 0.0
    %568 = vmatpush2.xpose.msra.mxu0 0.0
    %569 = vmatprep.subr.mxu0 0.0
    %570 = vmatpush2.xpose.msra.mxu0 0.0
    %571 = vmatprep.subr.mxu0 0.0
    %572 = vmatpush2.xpose.msra.mxu0 0.0
    %573 = vmatprep.subr.mxu0 0.0
    %574 = vmatpush2.xpose.msra.mxu0 0.0
    %575 = vmatprep.mubr.f32.mxu0 0.0
    %v576 = vand.u32 %v56, 4294901760
    %v577 = vsub.f32 %v56, %v576
    %v578 = vand.u32 %v577, 4294901760
    %v579 = vsub.f32 %v577, %v578
    %v580 = vand.u32 %v579, 4294901760
    %581 = vmatmul.mubr.f32.gmra.mxu0 %v580
    %v582 = vpop.f32.mrf.mxu0
    %v583 = vadd.f32 0.0, %v582
    %v584 = vpop.f32.mrf.mxu0
    %585 = vdwg.mxu0
    %586 = vmatprep.subr.mxu0 0.0
    %587 = vmatpush1.xpose.msra.mxu0 0.0
    %588 = vmatprep.subr.mxu0 0.0
    %589 = vmatpush1.xpose.msra.mxu0 0.0
    %590 = vmatprep.subr.mxu0 0.0
    %591 = vmatpush1.xpose.msra.mxu0 0.0
    %592 = vmatprep.subr.mxu0 0.0
    %593 = vmatpush1.xpose.msra.mxu0 0.0
    %594 = vmatprep.subr.mxu0 0.0
    %595 = vmatpush1.xpose.msra.mxu0 0.0
    %596 = vmatprep.subr.mxu0 0.0
    %597 = vmatpush1.xpose.msra.mxu0 0.0
    %598 = vmatprep.subr.mxu0 0.0
    %599 = vmatpush1.xpose.msra.mxu0 0.0
    %600 = vmatprep.subr.mxu0 0.0
    %601 = vmatpush1.xpose.msra.mxu0 0.0
    %602 = vmatprep.subr.mxu0 0.0
    %603 = vmatpush1.xpose.msra.mxu0 0.0
    %604 = vmatprep.subr.mxu0 0.0
    %605 = vmatpush1.xpose.msra.mxu0 0.0
    %606 = vmatprep.subr.mxu0 0.0
    %607 = vmatpush1.xpose.msra.mxu0 0.0
    %608 = vmatprep.subr.mxu0 0.0
    %609 = vmatpush1.xpose.msra.mxu0 0.0
    %610 = vmatprep.subr.mxu0 0.0
    %611 = vmatpush1.xpose.msra.mxu0 0.0
    %612 = vmatprep.subr.mxu0 0.0
    %613 = vmatpush1.xpose.msra.mxu0 0.0
    %614 = vmatprep.subr.mxu0 0.0
    %615 = vmatpush1.xpose.msra.mxu0 0.0
    %616 = vmatprep.subr.mxu0 0.0
    %v617 = vand.u32 %v509, 4294901760
    %v618 = vsub.f32 %v509, %v617
    %v619 = vand.u32 %v618, 4294901760
    %v620 = vsub.f32 %v618, %v619
    %v621 = vand.u32 %v620, 4294901760
    %622 = vmatpush1.xpose.msra.mxu0 %v621
    %623 = vmatprep.subr.mxu0 0.0
    %624 = vmatpush2.xpose.msra.mxu0 0.0
    %625 = vmatprep.subr.mxu0 0.0
    %626 = vmatpush2.xpose.msra.mxu0 0.0
    %627 = vmatprep.subr.mxu0 0.0
    %628 = vmatpush2.xpose.msra.mxu0 0.0
    %629 = vmatprep.subr.mxu0 0.0
    %630 = vmatpush2.xpose.msra.mxu0 0.0
    %631 = vmatprep.subr.mxu0 0.0
    %632 = vmatpush2.xpose.msra.mxu0 0.0
    %633 = vmatprep.subr.mxu0 0.0
    %634 = vmatpush2.xpose.msra.mxu0 0.0
    %635 = vmatprep.subr.mxu0 0.0
    %636 = vmatpush2.xpose.msra.mxu0 0.0
    %637 = vmatprep.subr.mxu0 0.0
    %638 = vmatpush2.xpose.msra.mxu0 0.0
    %639 = vmatprep.subr.mxu0 0.0
    %640 = vmatpush2.xpose.msra.mxu0 0.0
    %641 = vmatprep.subr.mxu0 0.0
    %642 = vmatpush2.xpose.msra.mxu0 0.0
    %643 = vmatprep.subr.mxu0 0.0
    %644 = vmatpush2.xpose.msra.mxu0 0.0
    %645 = vmatprep.subr.mxu0 0.0
    %646 = vmatpush2.xpose.msra.mxu0 0.0
    %647 = vmatprep.subr.mxu0 0.0
    %648 = vmatpush2.xpose.msra.mxu0 0.0
    %649 = vmatprep.subr.mxu0 0.0
    %650 = vmatpush2.xpose.msra.mxu0 0.0
    %651 = vmatprep.subr.mxu0 0.0
    %652 = vmatpush2.xpose.msra.mxu0 0.0
    %653 = vmatprep.subr.mxu0 0.0
    %654 = vmatpush2.xpose.msra.mxu0 0.0
    %655 = vmatprep.mubr.f32.mxu0 0.0
    %v656 = vand.u32 %v56, 4294901760
    %657 = vmatmul.mubr.f32.gmra.mxu0 %v656
    %v658 = vpop.f32.mrf.mxu0
    %v659 = vadd.f32 %v583, %v658
    %v660 = vpop.f32.mrf.mxu0
    %661 = vdwg.mxu0
    %662 = vmatprep.subr.mxu0 0.0
    %663 = vmatpush1.xpose.msra.mxu0 0.0
    %664 = vmatprep.subr.mxu0 0.0
    %665 = vmatpush1.xpose.msra.mxu0 0.0
    %666 = vmatprep.subr.mxu0 0.0
    %667 = vmatpush1.xpose.msra.mxu0 0.0
    %668 = vmatprep.subr.mxu0 0.0
    %669 = vmatpush1.xpose.msra.mxu0 0.0
    %670 = vmatprep.subr.mxu0 0.0
    %671 = vmatpush1.xpose.msra.mxu0 0.0
    %672 = vmatprep.subr.mxu0 0.0
    %673 = vmatpush1.xpose.msra.mxu0 0.0
    %674 = vmatprep.subr.mxu0 0.0
    %675 = vmatpush1.xpose.msra.mxu0 0.0
    %676 = vmatprep.subr.mxu0 0.0
    %677 = vmatpush1.xpose.msra.mxu0 0.0
    %678 = vmatprep.subr.mxu0 0.0
    %679 = vmatpush1.xpose.msra.mxu0 0.0
    %680 = vmatprep.subr.mxu0 0.0
    %681 = vmatpush1.xpose.msra.mxu0 0.0
    %682 = vmatprep.subr.mxu0 0.0
    %683 = vmatpush1.xpose.msra.mxu0 0.0
    %684 = vmatprep.subr.mxu0 0.0
    %685 = vmatpush1.xpose.msra.mxu0 0.0
    %686 = vmatprep.subr.mxu0 0.0
    %687 = vmatpush1.xpose.msra.mxu0 0.0
    %688 = vmatprep.subr.mxu0 0.0
    %689 = vmatpush1.xpose.msra.mxu0 0.0
    %690 = vmatprep.subr.mxu0 0.0
    %691 = vmatpush1.xpose.msra.mxu0 0.0
    %692 = vmatprep.subr.mxu0 0.0
    %v693 = vand.u32 %v509, 4294901760
    %v694 = vsub.f32 %v509, %v693
    %695 = vmatpush1.xpose.msra.mxu0 %v694
    %696 = vmatprep.subr.mxu0 0.0
    %697 = vmatpush2.xpose.msra.mxu0 0.0
    %698 = vmatprep.subr.mxu0 0.0
    %699 = vmatpush2.xpose.msra.mxu0 0.0
    %700 = vmatprep.subr.mxu0 0.0
    %701 = vmatpush2.xpose.msra.mxu0 0.0
    %702 = vmatprep.subr.mxu0 0.0
    %703 = vmatpush2.xpose.msra.mxu0 0.0
    %704 = vmatprep.subr.mxu0 0.0
    %705 = vmatpush2.xpose.msra.mxu0 0.0
    %706 = vmatprep.subr.mxu0 0.0
    %707 = vmatpush2.xpose.msra.mxu0 0.0
    %708 = vmatprep.subr.mxu0 0.0
    %709 = vmatpush2.xpose.msra.mxu0 0.0
    %710 = vmatprep.subr.mxu0 0.0
    %711 = vmatpush2.xpose.msra.mxu0 0.0
    %712 = vmatprep.subr.mxu0 0.0
    %713 = vmatpush2.xpose.msra.mxu0 0.0
    %714 = vmatprep.subr.mxu0 0.0
    %715 = vmatpush2.xpose.msra.mxu0 0.0
    %716 = vmatprep.subr.mxu0 0.0
    %717 = vmatpush2.xpose.msra.mxu0 0.0
    %718 = vmatprep.subr.mxu0 0.0
    %719 = vmatpush2.xpose.msra.mxu0 0.0
    %720 = vmatprep.subr.mxu0 0.0
    %721 = vmatpush2.xpose.msra.mxu0 0.0
    %722 = vmatprep.subr.mxu0 0.0
    %723 = vmatpush2.xpose.msra.mxu0 0.0
    %724 = vmatprep.subr.mxu0 0.0
    %725 = vmatpush2.xpose.msra.mxu0 0.0
    %726 = vmatprep.subr.mxu0 0.0
    %727 = vmatpush2.xpose.msra.mxu0 0.0
    %728 = vmatprep.mubr.f32.mxu0 0.0
    %v729 = vand.u32 %v56, 4294901760
    %v730 = vsub.f32 %v56, %v729
    %731 = vmatmul.mubr.f32.gmra.mxu0 %v730
    %v732 = vpop.f32.mrf.mxu0
    %v733 = vadd.f32 %v659, %v732
    %v734 = vpop.f32.mrf.mxu0
    %735 = vdwg.mxu0
    %736 = vmatprep.subr.mxu0 0.0
    %737 = vmatpush1.xpose.msra.mxu0 0.0
    %738 = vmatprep.subr.mxu0 0.0
    %739 = vmatpush1.xpose.msra.mxu0 0.0
    %740 = vmatprep.subr.mxu0 0.0
    %741 = vmatpush1.xpose.msra.mxu0 0.0
    %742 = vmatprep.subr.mxu0 0.0
    %743 = vmatpush1.xpose.msra.mxu0 0.0
    %744 = vmatprep.subr.mxu0 0.0
    %745 = vmatpush1.xpose.msra.mxu0 0.0
    %746 = vmatprep.subr.mxu0 0.0
    %747 = vmatpush1.xpose.msra.mxu0 0.0
    %748 = vmatprep.subr.mxu0 0.0
    %749 = vmatpush1.xpose.msra.mxu0 0.0
    %750 = vmatprep.subr.mxu0 0.0
    %751 = vmatpush1.xpose.msra.mxu0 0.0
    %752 = vmatprep.subr.mxu0 0.0
    %753 = vmatpush1.xpose.msra.mxu0 0.0
    %754 = vmatprep.subr.mxu0 0.0
    %755 = vmatpush1.xpose.msra.mxu0 0.0
    %756 = vmatprep.subr.mxu0 0.0
    %757 = vmatpush1.xpose.msra.mxu0 0.0
    %758 = vmatprep.subr.mxu0 0.0
    %759 = vmatpush1.xpose.msra.mxu0 0.0
    %760 = vmatprep.subr.mxu0 0.0
    %761 = vmatpush1.xpose.msra.mxu0 0.0
    %762 = vmatprep.subr.mxu0 0.0
    %763 = vmatpush1.xpose.msra.mxu0 0.0
    %764 = vmatprep.subr.mxu0 0.0
    %765 = vmatpush1.xpose.msra.mxu0 0.0
    %766 = vmatprep.subr.mxu0 0.0
    %v767 = vand.u32 %v509, 4294901760
    %768 = vmatpush1.xpose.msra.mxu0 %v767
    %769 = vmatprep.subr.mxu0 0.0
    %770 = vmatpush2.xpose.msra.mxu0 0.0
    %771 = vmatprep.subr.mxu0 0.0
    %772 = vmatpush2.xpose.msra.mxu0 0.0
    %773 = vmatprep.subr.mxu0 0.0
    %774 = vmatpush2.xpose.msra.mxu0 0.0
    %775 = vmatprep.subr.mxu0 0.0
    %776 = vmatpush2.xpose.msra.mxu0 0.0
    %777 = vmatprep.subr.mxu0 0.0
    %778 = vmatpush2.xpose.msra.mxu0 0.0
    %779 = vmatprep.subr.mxu0 0.0
    %780 = vmatpush2.xpose.msra.mxu0 0.0
    %781 = vmatprep.subr.mxu0 0.0
    %782 = vmatpush2.xpose.msra.mxu0 0.0
    %783 = vmatprep.subr.mxu0 0.0
    %784 = vmatpush2.xpose.msra.mxu0 0.0
    %785 = vmatprep.subr.mxu0 0.0
    %786 = vmatpush2.xpose.msra.mxu0 0.0
    %787 = vmatprep.subr.mxu0 0.0
    %788 = vmatpush2.xpose.msra.mxu0 0.0
    %789 = vmatprep.subr.mxu0 0.0
    %790 = vmatpush2.xpose.msra.mxu0 0.0
    %791 = vmatprep.subr.mxu0 0.0
    %792 = vmatpush2.xpose.msra.mxu0 0.0
    %793 = vmatprep.subr.mxu0 0.0
    %794 = vmatpush2.xpose.msra.mxu0 0.0
    %795 = vmatprep.subr.mxu0 0.0
    %796 = vmatpush2.xpose.msra.mxu0 0.0
    %797 = vmatprep.subr.mxu0 0.0
    %798 = vmatpush2.xpose.msra.mxu0 0.0
    %799 = vmatprep.subr.mxu0 0.0
    %800 = vmatpush2.xpose.msra.mxu0 0.0
    %801 = vmatprep.mubr.f32.mxu0 0.0
    %v802 = vand.u32 %v56, 4294901760
    %v803 = vsub.f32 %v56, %v802
    %v804 = vand.u32 %v803, 4294901760
    %805 = vmatmul.mubr.f32.gmra.mxu0 %v804
    %v806 = vpop.f32.mrf.mxu0
    %v807 = vadd.f32 %v733, %v806
    %v808 = vpop.f32.mrf.mxu0
    %809 = vdwg.mxu0
    %810 = vmatprep.subr.mxu0 0.0
    %811 = vmatpush1.xpose.msra.mxu0 0.0
    %812 = vmatprep.subr.mxu0 0.0
    %813 = vmatpush1.xpose.msra.mxu0 0.0
    %814 = vmatprep.subr.mxu0 0.0
    %815 = vmatpush1.xpose.msra.mxu0 0.0
    %816 = vmatprep.subr.mxu0 0.0
    %817 = vmatpush1.xpose.msra.mxu0 0.0
    %818 = vmatprep.subr.mxu0 0.0
    %819 = vmatpush1.xpose.msra.mxu0 0.0
    %820 = vmatprep.subr.mxu0 0.0
    %821 = vmatpush1.xpose.msra.mxu0 0.0
    %822 = vmatprep.subr.mxu0 0.0
    %823 = vmatpush1.xpose.msra.mxu0 0.0
    %824 = vmatprep.subr.mxu0 0.0
    %825 = vmatpush1.xpose.msra.mxu0 0.0
    %826 = vmatprep.subr.mxu0 0.0
    %827 = vmatpush1.xpose.msra.mxu0 0.0
    %828 = vmatprep.subr.mxu0 0.0
    %829 = vmatpush1.xpose.msra.mxu0 0.0
    %830 = vmatprep.subr.mxu0 0.0
    %831 = vmatpush1.xpose.msra.mxu0 0.0
    %832 = vmatprep.subr.mxu0 0.0
    %833 = vmatpush1.xpose.msra.mxu0 0.0
    %834 = vmatprep.subr.mxu0 0.0
    %835 = vmatpush1.xpose.msra.mxu0 0.0
    %836 = vmatprep.subr.mxu0 0.0
    %837 = vmatpush1.xpose.msra.mxu0 0.0
    %838 = vmatprep.subr.mxu0 0.0
    %839 = vmatpush1.xpose.msra.mxu0 0.0
    %840 = vmatprep.subr.mxu0 0.0
    %v841 = vand.u32 %v509, 4294901760
    %v842 = vsub.f32 %v509, %v841
    %v843 = vand.u32 %v842, 4294901760
    %844 = vmatpush1.xpose.msra.mxu0 %v843
    %845 = vmatprep.subr.mxu0 0.0
    %846 = vmatpush2.xpose.msra.mxu0 0.0
    %847 = vmatprep.subr.mxu0 0.0
    %848 = vmatpush2.xpose.msra.mxu0 0.0
    %849 = vmatprep.subr.mxu0 0.0
    %850 = vmatpush2.xpose.msra.mxu0 0.0
    %851 = vmatprep.subr.mxu0 0.0
    %852 = vmatpush2.xpose.msra.mxu0 0.0
    %853 = vmatprep.subr.mxu0 0.0
    %854 = vmatpush2.xpose.msra.mxu0 0.0
    %855 = vmatprep.subr.mxu0 0.0
    %856 = vmatpush2.xpose.msra.mxu0 0.0
    %857 = vmatprep.subr.mxu0 0.0
    %858 = vmatpush2.xpose.msra.mxu0 0.0
    %859 = vmatprep.subr.mxu0 0.0
    %860 = vmatpush2.xpose.msra.mxu0 0.0
    %861 = vmatprep.subr.mxu0 0.0
    %862 = vmatpush2.xpose.msra.mxu0 0.0
    %863 = vmatprep.subr.mxu0 0.0
    %864 = vmatpush2.xpose.msra.mxu0 0.0
    %865 = vmatprep.subr.mxu0 0.0
    %866 = vmatpush2.xpose.msra.mxu0 0.0
    %867 = vmatprep.subr.mxu0 0.0
    %868 = vmatpush2.xpose.msra.mxu0 0.0
    %869 = vmatprep.subr.mxu0 0.0
    %870 = vmatpush2.xpose.msra.mxu0 0.0
    %871 = vmatprep.subr.mxu0 0.0
    %872 = vmatpush2.xpose.msra.mxu0 0.0
    %873 = vmatprep.subr.mxu0 0.0
    %874 = vmatpush2.xpose.msra.mxu0 0.0
    %875 = vmatprep.subr.mxu0 0.0
    %876 = vmatpush2.xpose.msra.mxu0 0.0
    %877 = vmatprep.mubr.f32.mxu0 0.0
    %v878 = vand.u32 %v56, 4294901760
    %879 = vmatmul.mubr.f32.gmra.mxu0 %v878
    %v880 = vpop.f32.mrf.mxu0
    %v881 = vadd.f32 %v807, %v880
    %v882 = vpop.f32.mrf.mxu0
    %883 = vdwg.mxu0
    %884 = vmatprep.subr.mxu0 0.0
    %885 = vmatpush1.xpose.msra.mxu0 0.0
    %886 = vmatprep.subr.mxu0 0.0
    %887 = vmatpush1.xpose.msra.mxu0 0.0
    %888 = vmatprep.subr.mxu0 0.0
    %889 = vmatpush1.xpose.msra.mxu0 0.0
    %890 = vmatprep.subr.mxu0 0.0
    %891 = vmatpush1.xpose.msra.mxu0 0.0
    %892 = vmatprep.subr.mxu0 0.0
    %893 = vmatpush1.xpose.msra.mxu0 0.0
    %894 = vmatprep.subr.mxu0 0.0
    %895 = vmatpush1.xpose.msra.mxu0 0.0
    %896 = vmatprep.subr.mxu0 0.0
    %897 = vmatpush1.xpose.msra.mxu0 0.0
    %898 = vmatprep.subr.mxu0 0.0
    %899 = vmatpush1.xpose.msra.mxu0 0.0
    %900 = vmatprep.subr.mxu0 0.0
    %901 = vmatpush1.xpose.msra.mxu0 0.0
    %902 = vmatprep.subr.mxu0 0.0
    %903 = vmatpush1.xpose.msra.mxu0 0.0
    %904 = vmatprep.subr.mxu0 0.0
    %905 = vmatpush1.xpose.msra.mxu0 0.0
    %906 = vmatprep.subr.mxu0 0.0
    %907 = vmatpush1.xpose.msra.mxu0 0.0
    %908 = vmatprep.subr.mxu0 0.0
    %909 = vmatpush1.xpose.msra.mxu0 0.0
    %910 = vmatprep.subr.mxu0 0.0
    %911 = vmatpush1.xpose.msra.mxu0 0.0
    %912 = vmatprep.subr.mxu0 0.0
    %913 = vmatpush1.xpose.msra.mxu0 0.0
    %914 = vmatprep.subr.mxu0 0.0
    %v915 = vand.u32 %v509, 4294901760
    %916 = vmatpush1.xpose.msra.mxu0 %v915
    %917 = vmatprep.subr.mxu0 0.0
    %918 = vmatpush2.xpose.msra.mxu0 0.0
    %919 = vmatprep.subr.mxu0 0.0
    %920 = vmatpush2.xpose.msra.mxu0 0.0
    %921 = vmatprep.subr.mxu0 0.0
    %922 = vmatpush2.xpose.msra.mxu0 0.0
    %923 = vmatprep.subr.mxu0 0.0
    %924 = vmatpush2.xpose.msra.mxu0 0.0
    %925 = vmatprep.subr.mxu0 0.0
    %926 = vmatpush2.xpose.msra.mxu0 0.0
    %927 = vmatprep.subr.mxu0 0.0
    %928 = vmatpush2.xpose.msra.mxu0 0.0
    %929 = vmatprep.subr.mxu0 0.0
    %930 = vmatpush2.xpose.msra.mxu0 0.0
    %931 = vmatprep.subr.mxu0 0.0
    %932 = vmatpush2.xpose.msra.mxu0 0.0
    %933 = vmatprep.subr.mxu0 0.0
    %934 = vmatpush2.xpose.msra.mxu0 0.0
    %935 = vmatprep.subr.mxu0 0.0
    %936 = vmatpush2.xpose.msra.mxu0 0.0
    %937 = vmatprep.subr.mxu0 0.0
    %938 = vmatpush2.xpose.msra.mxu0 0.0
    %939 = vmatprep.subr.mxu0 0.0
    %940 = vmatpush2.xpose.msra.mxu0 0.0
    %941 = vmatprep.subr.mxu0 0.0
    %942 = vmatpush2.xpose.msra.mxu0 0.0
    %943 = vmatprep.subr.mxu0 0.0
    %944 = vmatpush2.xpose.msra.mxu0 0.0
    %945 = vmatprep.subr.mxu0 0.0
    %946 = vmatpush2.xpose.msra.mxu0 0.0
    %947 = vmatprep.subr.mxu0 0.0
    %948 = vmatpush2.xpose.msra.mxu0 0.0
    %949 = vmatprep.mubr.f32.mxu0 0.0
    %v950 = vand.u32 %v56, 4294901760
    %951 = vmatmul.mubr.f32.gmra.mxu0 %v950
    %v952 = vpop.f32.mrf.mxu0
    %v953 = vadd.f32 %v881, %v952
    %v954 = vpop.f32.mrf.mxu0
    %955 = vdwg.mxu0
    %v956 = vadd.f32 %v508, %v953
    %957 = vst.msk [vmem:[#allocation3] sm:$0xf] %vm506, %v956
    %v958 = vld [vmem:[#allocation4] sm:$0xf]
    %v959 = vmul.f32 %v45, %v45
    %960 = vmatprep.subr.mxu0 0.0
    %961 = vmatpush1.xpose.msra.mxu0 0.0
    %962 = vmatprep.subr.mxu0 0.0
    %963 = vmatpush1.xpose.msra.mxu0 0.0
    %964 = vmatprep.subr.mxu0 0.0
    %965 = vmatpush1.xpose.msra.mxu0 0.0
    %966 = vmatprep.subr.mxu0 0.0
    %967 = vmatpush1.xpose.msra.mxu0 0.0
    %968 = vmatprep.subr.mxu0 0.0
    %969 = vmatpush1.xpose.msra.mxu0 0.0
    %970 = vmatprep.subr.mxu0 0.0
    %971 = vmatpush1.xpose.msra.mxu0 0.0
    %972 = vmatprep.subr.mxu0 0.0
    %973 = vmatpush1.xpose.msra.mxu0 0.0
    %974 = vmatprep.subr.mxu0 0.0
    %975 = vmatpush1.xpose.msra.mxu0 0.0
    %976 = vmatprep.subr.mxu0 0.0
    %977 = vmatpush1.xpose.msra.mxu0 0.0
    %978 = vmatprep.subr.mxu0 0.0
    %979 = vmatpush1.xpose.msra.mxu0 0.0
    %980 = vmatprep.subr.mxu0 0.0
    %981 = vmatpush1.xpose.msra.mxu0 0.0
    %982 = vmatprep.subr.mxu0 0.0
    %983 = vmatpush1.xpose.msra.mxu0 0.0
    %984 = vmatprep.subr.mxu0 0.0
    %985 = vmatpush1.xpose.msra.mxu0 0.0
    %986 = vmatprep.subr.mxu0 0.0
    %987 = vmatpush1.xpose.msra.mxu0 0.0
    %988 = vmatprep.subr.mxu0 0.0
    %989 = vmatpush1.xpose.msra.mxu0 0.0
    %990 = vmatprep.subr.mxu0 0.0
    %v991 = vand.u32 %v959, 4294901760
    %992 = vmatpush1.xpose.msra.mxu0 %v991
    %993 = vmatprep.subr.mxu0 0.0
    %994 = vmatpush2.xpose.msra.mxu0 0.0
    %995 = vmatprep.subr.mxu0 0.0
    %996 = vmatpush2.xpose.msra.mxu0 0.0
    %997 = vmatprep.subr.mxu0 0.0
    %998 = vmatpush2.xpose.msra.mxu0 0.0
    %999 = vmatprep.subr.mxu0 0.0
    %1000 = vmatpush2.xpose.msra.mxu0 0.0
    %1001 = vmatprep.subr.mxu0 0.0
    %1002 = vmatpush2.xpose.msra.mxu0 0.0
    %1003 = vmatprep.subr.mxu0 0.0
    %1004 = vmatpush2.xpose.msra.mxu0 0.0
    %1005 = vmatprep.subr.mxu0 0.0
    %1006 = vmatpush2.xpose.msra.mxu0 0.0
    %1007 = vmatprep.subr.mxu0 0.0
    %1008 = vmatpush2.xpose.msra.mxu0 0.0
    %1009 = vmatprep.subr.mxu0 0.0
    %1010 = vmatpush2.xpose.msra.mxu0 0.0
    %1011 = vmatprep.subr.mxu0 0.0
    %1012 = vmatpush2.xpose.msra.mxu0 0.0
    %1013 = vmatprep.subr.mxu0 0.0
    %1014 = vmatpush2.xpose.msra.mxu0 0.0
    %1015 = vmatprep.subr.mxu0 0.0
    %1016 = vmatpush2.xpose.msra.mxu0 0.0
    %1017 = vmatprep.subr.mxu0 0.0
    %1018 = vmatpush2.xpose.msra.mxu0 0.0
    %1019 = vmatprep.subr.mxu0 0.0
    %1020 = vmatpush2.xpose.msra.mxu0 0.0
    %1021 = vmatprep.subr.mxu0 0.0
    %1022 = vmatpush2.xpose.msra.mxu0 0.0
    %1023 = vmatprep.subr.mxu0 0.0
    %1024 = vmatpush2.xpose.msra.mxu0 0.0
    %1025 = vmatprep.mubr.f32.mxu0 0.0
    %v1026 = vand.u32 %v56, 4294901760
    %v1027 = vsub.f32 %v56, %v1026
    %v1028 = vand.u32 %v1027, 4294901760
    %v1029 = vsub.f32 %v1027, %v1028
    %v1030 = vand.u32 %v1029, 4294901760
    %1031 = vmatmul.mubr.f32.gmra.mxu0 %v1030
    %v1032 = vpop.f32.mrf.mxu0
    %v1033 = vadd.f32 0.0, %v1032
    %v1034 = vpop.f32.mrf.mxu0
    %1035 = vdwg.mxu0
    %1036 = vmatprep.subr.mxu0 0.0
    %1037 = vmatpush1.xpose.msra.mxu0 0.0
    %1038 = vmatprep.subr.mxu0 0.0
    %1039 = vmatpush1.xpose.msra.mxu0 0.0
    %1040 = vmatprep.subr.mxu0 0.0
    %1041 = vmatpush1.xpose.msra.mxu0 0.0
    %1042 = vmatprep.subr.mxu0 0.0
    %1043 = vmatpush1.xpose.msra.mxu0 0.0
    %1044 = vmatprep.subr.mxu0 0.0
    %1045 = vmatpush1.xpose.msra.mxu0 0.0
    %1046 = vmatprep.subr.mxu0 0.0
    %1047 = vmatpush1.xpose.msra.mxu0 0.0
    %1048 = vmatprep.subr.mxu0 0.0
    %1049 = vmatpush1.xpose.msra.mxu0 0.0
    %1050 = vmatprep.subr.mxu0 0.0
    %1051 = vmatpush1.xpose.msra.mxu0 0.0
    %1052 = vmatprep.subr.mxu0 0.0
    %1053 = vmatpush1.xpose.msra.mxu0 0.0
    %1054 = vmatprep.subr.mxu0 0.0
    %1055 = vmatpush1.xpose.msra.mxu0 0.0
    %1056 = vmatprep.subr.mxu0 0.0
    %1057 = vmatpush1.xpose.msra.mxu0 0.0
    %1058 = vmatprep.subr.mxu0 0.0
    %1059 = vmatpush1.xpose.msra.mxu0 0.0
    %1060 = vmatprep.subr.mxu0 0.0
    %1061 = vmatpush1.xpose.msra.mxu0 0.0
    %1062 = vmatprep.subr.mxu0 0.0
    %1063 = vmatpush1.xpose.msra.mxu0 0.0
    %1064 = vmatprep.subr.mxu0 0.0
    %1065 = vmatpush1.xpose.msra.mxu0 0.0
    %1066 = vmatprep.subr.mxu0 0.0
    %v1067 = vand.u32 %v959, 4294901760
    %v1068 = vsub.f32 %v959, %v1067
    %v1069 = vand.u32 %v1068, 4294901760
    %v1070 = vsub.f32 %v1068, %v1069
    %v1071 = vand.u32 %v1070, 4294901760
    %1072 = vmatpush1.xpose.msra.mxu0 %v1071
    %1073 = vmatprep.subr.mxu0 0.0
    %1074 = vmatpush2.xpose.msra.mxu0 0.0
    %1075 = vmatprep.subr.mxu0 0.0
    %1076 = vmatpush2.xpose.msra.mxu0 0.0
    %1077 = vmatprep.subr.mxu0 0.0
    %1078 = vmatpush2.xpose.msra.mxu0 0.0
    %1079 = vmatprep.subr.mxu0 0.0
    %1080 = vmatpush2.xpose.msra.mxu0 0.0
    %1081 = vmatprep.subr.mxu0 0.0
    %1082 = vmatpush2.xpose.msra.mxu0 0.0
    %1083 = vmatprep.subr.mxu0 0.0
    %1084 = vmatpush2.xpose.msra.mxu0 0.0
    %1085 = vmatprep.subr.mxu0 0.0
    %1086 = vmatpush2.xpose.msra.mxu0 0.0
    %1087 = vmatprep.subr.mxu0 0.0
    %1088 = vmatpush2.xpose.msra.mxu0 0.0
    %1089 = vmatprep.subr.mxu0 0.0
    %1090 = vmatpush2.xpose.msra.mxu0 0.0
    %1091 = vmatprep.subr.mxu0 0.0
    %1092 = vmatpush2.xpose.msra.mxu0 0.0
    %1093 = vmatprep.subr.mxu0 0.0
    %1094 = vmatpush2.xpose.msra.mxu0 0.0
    %1095 = vmatprep.subr.mxu0 0.0
    %1096 = vmatpush2.xpose.msra.mxu0 0.0
    %1097 = vmatprep.subr.mxu0 0.0
    %1098 = vmatpush2.xpose.msra.mxu0 0.0
    %1099 = vmatprep.subr.mxu0 0.0
    %1100 = vmatpush2.xpose.msra.mxu0 0.0
    %1101 = vmatprep.subr.mxu0 0.0
    %1102 = vmatpush2.xpose.msra.mxu0 0.0
    %1103 = vmatprep.subr.mxu0 0.0
    %1104 = vmatpush2.xpose.msra.mxu0 0.0
    %1105 = vmatprep.mubr.f32.mxu0 0.0
    %v1106 = vand.u32 %v56, 4294901760
    %1107 = vmatmul.mubr.f32.gmra.mxu0 %v1106
    %v1108 = vpop.f32.mrf.mxu0
    %v1109 = vadd.f32 %v1033, %v1108
    %v1110 = vpop.f32.mrf.mxu0
    %1111 = vdwg.mxu0
    %1112 = vmatprep.subr.mxu0 0.0
    %1113 = vmatpush1.xpose.msra.mxu0 0.0
    %1114 = vmatprep.subr.mxu0 0.0
    %1115 = vmatpush1.xpose.msra.mxu0 0.0
    %1116 = vmatprep.subr.mxu0 0.0
    %1117 = vmatpush1.xpose.msra.mxu0 0.0
    %1118 = vmatprep.subr.mxu0 0.0
    %1119 = vmatpush1.xpose.msra.mxu0 0.0
    %1120 = vmatprep.subr.mxu0 0.0
    %1121 = vmatpush1.xpose.msra.mxu0 0.0
    %1122 = vmatprep.subr.mxu0 0.0
    %1123 = vmatpush1.xpose.msra.mxu0 0.0
    %1124 = vmatprep.subr.mxu0 0.0
    %1125 = vmatpush1.xpose.msra.mxu0 0.0
    %1126 = vmatprep.subr.mxu0 0.0
    %1127 = vmatpush1.xpose.msra.mxu0 0.0
    %1128 = vmatprep.subr.mxu0 0.0
    %1129 = vmatpush1.xpose.msra.mxu0 0.0
    %1130 = vmatprep.subr.mxu0 0.0
    %1131 = vmatpush1.xpose.msra.mxu0 0.0
    %1132 = vmatprep.subr.mxu0 0.0
    %1133 = vmatpush1.xpose.msra.mxu0 0.0
    %1134 = vmatprep.subr.mxu0 0.0
    %1135 = vmatpush1.xpose.msra.mxu0 0.0
    %1136 = vmatprep.subr.mxu0 0.0
    %1137 = vmatpush1.xpose.msra.mxu0 0.0
    %1138 = vmatprep.subr.mxu0 0.0
    %1139 = vmatpush1.xpose.msra.mxu0 0.0
    %1140 = vmatprep.subr.mxu0 0.0
    %1141 = vmatpush1.xpose.msra.mxu0 0.0
    %1142 = vmatprep.subr.mxu0 0.0
    %v1143 = vand.u32 %v959, 4294901760
    %v1144 = vsub.f32 %v959, %v1143
    %1145 = vmatpush1.xpose.msra.mxu0 %v1144
    %1146 = vmatprep.subr.mxu0 0.0
    %1147 = vmatpush2.xpose.msra.mxu0 0.0
    %1148 = vmatprep.subr.mxu0 0.0
    %1149 = vmatpush2.xpose.msra.mxu0 0.0
    %1150 = vmatprep.subr.mxu0 0.0
    %1151 = vmatpush2.xpose.msra.mxu0 0.0
    %1152 = vmatprep.subr.mxu0 0.0
    %1153 = vmatpush2.xpose.msra.mxu0 0.0
    %1154 = vmatprep.subr.mxu0 0.0
    %1155 = vmatpush2.xpose.msra.mxu0 0.0
    %1156 = vmatprep.subr.mxu0 0.0
    %1157 = vmatpush2.xpose.msra.mxu0 0.0
    %1158 = vmatprep.subr.mxu0 0.0
    %1159 = vmatpush2.xpose.msra.mxu0 0.0
    %1160 = vmatprep.subr.mxu0 0.0
    %1161 = vmatpush2.xpose.msra.mxu0 0.0
    %1162 = vmatprep.subr.mxu0 0.0
    %1163 = vmatpush2.xpose.msra.mxu0 0.0
    %1164 = vmatprep.subr.mxu0 0.0
    %1165 = vmatpush2.xpose.msra.mxu0 0.0
    %1166 = vmatprep.subr.mxu0 0.0
    %1167 = vmatpush2.xpose.msra.mxu0 0.0
    %1168 = vmatprep.subr.mxu0 0.0
    %1169 = vmatpush2.xpose.msra.mxu0 0.0
    %1170 = vmatprep.subr.mxu0 0.0
    %1171 = vmatpush2.xpose.msra.mxu0 0.0
    %1172 = vmatprep.subr.mxu0 0.0
    %1173 = vmatpush2.xpose.msra.mxu0 0.0
    %1174 = vmatprep.subr.mxu0 0.0
    %1175 = vmatpush2.xpose.msra.mxu0 0.0
    %1176 = vmatprep.subr.mxu0 0.0
    %1177 = vmatpush2.xpose.msra.mxu0 0.0
    %1178 = vmatprep.mubr.f32.mxu0 0.0
    %v1179 = vand.u32 %v56, 4294901760
    %v1180 = vsub.f32 %v56, %v1179
    %1181 = vmatmul.mubr.f32.gmra.mxu0 %v1180
    %v1182 = vpop.f32.mrf.mxu0
    %v1183 = vadd.f32 %v1109, %v1182
    %v1184 = vpop.f32.mrf.mxu0
    %1185 = vdwg.mxu0
    %1186 = vmatprep.subr.mxu0 0.0
    %1187 = vmatpush1.xpose.msra.mxu0 0.0
    %1188 = vmatprep.subr.mxu0 0.0
    %1189 = vmatpush1.xpose.msra.mxu0 0.0
    %1190 = vmatprep.subr.mxu0 0.0
    %1191 = vmatpush1.xpose.msra.mxu0 0.0
    %1192 = vmatprep.subr.mxu0 0.0
    %1193 = vmatpush1.xpose.msra.mxu0 0.0
    %1194 = vmatprep.subr.mxu0 0.0
    %1195 = vmatpush1.xpose.msra.mxu0 0.0
    %1196 = vmatprep.subr.mxu0 0.0
    %1197 = vmatpush1.xpose.msra.mxu0 0.0
    %1198 = vmatprep.subr.mxu0 0.0
    %1199 = vmatpush1.xpose.msra.mxu0 0.0
    %1200 = vmatprep.subr.mxu0 0.0
    %1201 = vmatpush1.xpose.msra.mxu0 0.0
    %1202 = vmatprep.subr.mxu0 0.0
    %1203 = vmatpush1.xpose.msra.mxu0 0.0
    %1204 = vmatprep.subr.mxu0 0.0
    %1205 = vmatpush1.xpose.msra.mxu0 0.0
    %1206 = vmatprep.subr.mxu0 0.0
    %1207 = vmatpush1.xpose.msra.mxu0 0.0
    %1208 = vmatprep.subr.mxu0 0.0
    %1209 = vmatpush1.xpose.msra.mxu0 0.0
    %1210 = vmatprep.subr.mxu0 0.0
    %1211 = vmatpush1.xpose.msra.mxu0 0.0
    %1212 = vmatprep.subr.mxu0 0.0
    %1213 = vmatpush1.xpose.msra.mxu0 0.0
    %1214 = vmatprep.subr.mxu0 0.0
    %1215 = vmatpush1.xpose.msra.mxu0 0.0
    %1216 = vmatprep.subr.mxu0 0.0
    %v1217 = vand.u32 %v959, 4294901760
    %1218 = vmatpush1.xpose.msra.mxu0 %v1217
    %1219 = vmatprep.subr.mxu0 0.0
    %1220 = vmatpush2.xpose.msra.mxu0 0.0
    %1221 = vmatprep.subr.mxu0 0.0
    %1222 = vmatpush2.xpose.msra.mxu0 0.0
    %1223 = vmatprep.subr.mxu0 0.0
    %1224 = vmatpush2.xpose.msra.mxu0 0.0
    %1225 = vmatprep.subr.mxu0 0.0
    %1226 = vmatpush2.xpose.msra.mxu0 0.0
    %1227 = vmatprep.subr.mxu0 0.0
    %1228 = vmatpush2.xpose.msra.mxu0 0.0
    %1229 = vmatprep.subr.mxu0 0.0
    %1230 = vmatpush2.xpose.msra.mxu0 0.0
    %1231 = vmatprep.subr.mxu0 0.0
    %1232 = vmatpush2.xpose.msra.mxu0 0.0
    %1233 = vmatprep.subr.mxu0 0.0
    %1234 = vmatpush2.xpose.msra.mxu0 0.0
    %1235 = vmatprep.subr.mxu0 0.0
    %1236 = vmatpush2.xpose.msra.mxu0 0.0
    %1237 = vmatprep.subr.mxu0 0.0
    %1238 = vmatpush2.xpose.msra.mxu0 0.0
    %1239 = vmatprep.subr.mxu0 0.0
    %1240 = vmatpush2.xpose.msra.mxu0 0.0
    %1241 = vmatprep.subr.mxu0 0.0
    %1242 = vmatpush2.xpose.msra.mxu0 0.0
    %1243 = vmatprep.subr.mxu0 0.0
    %1244 = vmatpush2.xpose.msra.mxu0 0.0
    %1245 = vmatprep.subr.mxu0 0.0
    %1246 = vmatpush2.xpose.msra.mxu0 0.0
    %1247 = vmatprep.subr.mxu0 0.0
    %1248 = vmatpush2.xpose.msra.mxu0 0.0
    %1249 = vmatprep.subr.mxu0 0.0
    %1250 = vmatpush2.xpose.msra.mxu0 0.0
    %1251 = vmatprep.mubr.f32.mxu0 0.0
    %v1252 = vand.u32 %v56, 4294901760
    %v1253 = vsub.f32 %v56, %v1252
    %v1254 = vand.u32 %v1253, 4294901760
    %1255 = vmatmul.mubr.f32.gmra.mxu0 %v1254
    %v1256 = vpop.f32.mrf.mxu0
    %v1257 = vadd.f32 %v1183, %v1256
    %v1258 = vpop.f32.mrf.mxu0
    %1259 = vdwg.mxu0
    %1260 = vmatprep.subr.mxu0 0.0
    %1261 = vmatpush1.xpose.msra.mxu0 0.0
    %1262 = vmatprep.subr.mxu0 0.0
    %1263 = vmatpush1.xpose.msra.mxu0 0.0
    %1264 = vmatprep.subr.mxu0 0.0
    %1265 = vmatpush1.xpose.msra.mxu0 0.0
    %1266 = vmatprep.subr.mxu0 0.0
    %1267 = vmatpush1.xpose.msra.mxu0 0.0
    %1268 = vmatprep.subr.mxu0 0.0
    %1269 = vmatpush1.xpose.msra.mxu0 0.0
    %1270 = vmatprep.subr.mxu0 0.0
    %1271 = vmatpush1.xpose.msra.mxu0 0.0
    %1272 = vmatprep.subr.mxu0 0.0
    %1273 = vmatpush1.xpose.msra.mxu0 0.0
    %1274 = vmatprep.subr.mxu0 0.0
    %1275 = vmatpush1.xpose.msra.mxu0 0.0
    %1276 = vmatprep.subr.mxu0 0.0
    %1277 = vmatpush1.xpose.msra.mxu0 0.0
    %1278 = vmatprep.subr.mxu0 0.0
    %1279 = vmatpush1.xpose.msra.mxu0 0.0
    %1280 = vmatprep.subr.mxu0 0.0
    %1281 = vmatpush1.xpose.msra.mxu0 0.0
    %1282 = vmatprep.subr.mxu0 0.0
    %1283 = vmatpush1.xpose.msra.mxu0 0.0
    %1284 = vmatprep.subr.mxu0 0.0
    %1285 = vmatpush1.xpose.msra.mxu0 0.0
    %1286 = vmatprep.subr.mxu0 0.0
    %1287 = vmatpush1.xpose.msra.mxu0 0.0
    %1288 = vmatprep.subr.mxu0 0.0
    %1289 = vmatpush1.xpose.msra.mxu0 0.0
    %1290 = vmatprep.subr.mxu0 0.0
    %v1291 = vand.u32 %v959, 4294901760
    %v1292 = vsub.f32 %v959, %v1291
    %v1293 = vand.u32 %v1292, 4294901760
    %1294 = vmatpush1.xpose.msra.mxu0 %v1293
    %1295 = vmatprep.subr.mxu0 0.0
    %1296 = vmatpush2.xpose.msra.mxu0 0.0
    %1297 = vmatprep.subr.mxu0 0.0
    %1298 = vmatpush2.xpose.msra.mxu0 0.0
    %1299 = vmatprep.subr.mxu0 0.0
    %1300 = vmatpush2.xpose.msra.mxu0 0.0
    %1301 = vmatprep.subr.mxu0 0.0
    %1302 = vmatpush2.xpose.msra.mxu0 0.0
    %1303 = vmatprep.subr.mxu0 0.0
    %1304 = vmatpush2.xpose.msra.mxu0 0.0
    %1305 = vmatprep.subr.mxu0 0.0
    %1306 = vmatpush2.xpose.msra.mxu0 0.0
    %1307 = vmatprep.subr.mxu0 0.0
    %1308 = vmatpush2.xpose.msra.mxu0 0.0
    %1309 = vmatprep.subr.mxu0 0.0
    %1310 = vmatpush2.xpose.msra.mxu0 0.0
    %1311 = vmatprep.subr.mxu0 0.0
    %1312 = vmatpush2.xpose.msra.mxu0 0.0
    %1313 = vmatprep.subr.mxu0 0.0
    %1314 = vmatpush2.xpose.msra.mxu0 0.0
    %1315 = vmatprep.subr.mxu0 0.0
    %1316 = vmatpush2.xpose.msra.mxu0 0.0
    %1317 = vmatprep.subr.mxu0 0.0
    %1318 = vmatpush2.xpose.msra.mxu0 0.0
    %1319 = vmatprep.subr.mxu0 0.0
    %1320 = vmatpush2.xpose.msra.mxu0 0.0
    %1321 = vmatprep.subr.mxu0 0.0
    %1322 = vmatpush2.xpose.msra.mxu0 0.0
    %1323 = vmatprep.subr.mxu0 0.0
    %1324 = vmatpush2.xpose.msra.mxu0 0.0
    %1325 = vmatprep.subr.mxu0 0.0
    %1326 = vmatpush2.xpose.msra.mxu0 0.0
    %1327 = vmatprep.mubr.f32.mxu0 0.0
    %v1328 = vand.u32 %v56, 4294901760
    %1329 = vmatmul.mubr.f32.gmra.mxu0 %v1328
    %v1330 = vpop.f32.mrf.mxu0
    %v1331 = vadd.f32 %v1257, %v1330
    %v1332 = vpop.f32.mrf.mxu0
    %1333 = vdwg.mxu0
    %1334 = vmatprep.subr.mxu0 0.0
    %1335 = vmatpush1.xpose.msra.mxu0 0.0
    %1336 = vmatprep.subr.mxu0 0.0
    %1337 = vmatpush1.xpose.msra.mxu0 0.0
    %1338 = vmatprep.subr.mxu0 0.0
    %1339 = vmatpush1.xpose.msra.mxu0 0.0
    %1340 = vmatprep.subr.mxu0 0.0
    %1341 = vmatpush1.xpose.msra.mxu0 0.0
    %1342 = vmatprep.subr.mxu0 0.0
    %1343 = vmatpush1.xpose.msra.mxu0 0.0
    %1344 = vmatprep.subr.mxu0 0.0
    %1345 = vmatpush1.xpose.msra.mxu0 0.0
    %1346 = vmatprep.subr.mxu0 0.0
    %1347 = vmatpush1.xpose.msra.mxu0 0.0
    %1348 = vmatprep.subr.mxu0 0.0
    %1349 = vmatpush1.xpose.msra.mxu0 0.0
    %1350 = vmatprep.subr.mxu0 0.0
    %1351 = vmatpush1.xpose.msra.mxu0 0.0
    %1352 = vmatprep.subr.mxu0 0.0
    %1353 = vmatpush1.xpose.msra.mxu0 0.0
    %1354 = vmatprep.subr.mxu0 0.0
    %1355 = vmatpush1.xpose.msra.mxu0 0.0
    %1356 = vmatprep.subr.mxu0 0.0
    %1357 = vmatpush1.xpose.msra.mxu0 0.0
    %1358 = vmatprep.subr.mxu0 0.0
    %1359 = vmatpush1.xpose.msra.mxu0 0.0
    %1360 = vmatprep.subr.mxu0 0.0
    %1361 = vmatpush1.xpose.msra.mxu0 0.0
    %1362 = vmatprep.subr.mxu0 0.0
    %1363 = vmatpush1.xpose.msra.mxu0 0.0
    %1364 = vmatprep.subr.mxu0 0.0
    %v1365 = vand.u32 %v959, 4294901760
    %1366 = vmatpush1.xpose.msra.mxu0 %v1365
    %1367 = vmatprep.subr.mxu0 0.0
    %1368 = vmatpush2.xpose.msra.mxu0 0.0
    %1369 = vmatprep.subr.mxu0 0.0
    %1370 = vmatpush2.xpose.msra.mxu0 0.0
    %1371 = vmatprep.subr.mxu0 0.0
    %1372 = vmatpush2.xpose.msra.mxu0 0.0
    %1373 = vmatprep.subr.mxu0 0.0
    %1374 = vmatpush2.xpose.msra.mxu0 0.0
    %1375 = vmatprep.subr.mxu0 0.0
    %1376 = vmatpush2.xpose.msra.mxu0 0.0
    %1377 = vmatprep.subr.mxu0 0.0
    %1378 = vmatpush2.xpose.msra.mxu0 0.0
    %1379 = vmatprep.subr.mxu0 0.0
    %1380 = vmatpush2.xpose.msra.mxu0 0.0
    %1381 = vmatprep.subr.mxu0 0.0
    %1382 = vmatpush2.xpose.msra.mxu0 0.0
    %1383 = vmatprep.subr.mxu0 0.0
    %1384 = vmatpush2.xpose.msra.mxu0 0.0
    %1385 = vmatprep.subr.mxu0 0.0
    %1386 = vmatpush2.xpose.msra.mxu0 0.0
    %1387 = vmatprep.subr.mxu0 0.0
    %1388 = vmatpush2.xpose.msra.mxu0 0.0
    %1389 = vmatprep.subr.mxu0 0.0
    %1390 = vmatpush2.xpose.msra.mxu0 0.0
    %1391 = vmatprep.subr.mxu0 0.0
    %1392 = vmatpush2.xpose.msra.mxu0 0.0
    %1393 = vmatprep.subr.mxu0 0.0
    %1394 = vmatpush2.xpose.msra.mxu0 0.0
    %1395 = vmatprep.subr.mxu0 0.0
    %1396 = vmatpush2.xpose.msra.mxu0 0.0
    %1397 = vmatprep.subr.mxu0 0.0
    %1398 = vmatpush2.xpose.msra.mxu0 0.0
    %1399 = vmatprep.mubr.f32.mxu0 0.0
    %v1400 = vand.u32 %v56, 4294901760
    %1401 = vmatmul.mubr.f32.gmra.mxu0 %v1400
    %v1402 = vpop.f32.mrf.mxu0
    %v1403 = vadd.f32 %v1331, %v1402
    %v1404 = vpop.f32.mrf.mxu0
    %1405 = vdwg.mxu0
    %v1406 = vadd.f32 %v958, %v1403
    %1407 = vst.msk [vmem:[#allocation4] sm:$0xf] %vm506, %v1406
    // Predicated region
    $region22: #{tpu_custom_call.1} parent=1 // pred_check
      %p1408 = pneg %p36
    $region23: #{tpu_custom_call.1} parent=1 // pred_check_branch
      %1410 = sbr.rel (%p1408) target = $region25
    $region24: #{tpu_custom_call.1} parent=1 // pred_region
      %v1411 = vld [vmem:[#allocation3] sm:$0xf]
      %v1412 = vadd.f32 %v1411, 1.0
      %v1413 = vrsqrt.pop %v1412
      %v1414 = vmul.f32 %v1412, %v1413
      %vm1415 = vcmp.eq.f32.partialorder %v1412, inf
      %v1416 = vsel %vm1415, %v1412, %v1414
      %vm1417 = vcmp.eq.f32.partialorder %v1412, 0.0
      %v1418 = vand.u32 %v1412, 2147483648
      %v1419 = vsel %vm1417, %v1418, %v1416
      %v1420 = vld [vmem:[#allocation4] sm:$0xf]
      %v1421 = vadd.f32 %v1420, 1.0
      %v1422 = vrsqrt.pop %v1421
      %v1423 = vmul.f32 %v1421, %v1422
      %vm1424 = vcmp.eq.f32.partialorder %v1421, inf
      %v1425 = vsel %vm1424, %v1421, %v1423
      %vm1426 = vcmp.eq.f32.partialorder %v1421, 0.0
      %v1427 = vand.u32 %v1421, 2147483648
      %v1428 = vsel %vm1426, %v1427, %v1425
      %v1429 = vmul.f32 %v1419, %v1428
      %v1430 = vld [vmem:[#allocation2] sm:$0xf]
      %v1431 = vsub.f32 %v1430, %v1429
      %v1432 = vmul.f32 %v1431, 2.0
      %v1433 = vsub.f32 -2.0, %v1432
      %1434 = vst.msk [vmem:[#allocation10] sm:$0xf] %vm506, %v1433
    $region25: #{tpu_custom_call.1} parent=1 // pred_fallthru
      _
    // Predicated region
    $region26: #{tpu_custom_call.1} parent=1 // pred_check
      _
    $region27: #{tpu_custom_call.1} parent=1 // pred_check_branch
      %1436 = sbr.rel (0) target = $region29
    $region28: #{tpu_custom_call.1} parent=1 // pred_region
      %s1438 = ssub.s32 64, 64
      %1439 = vsyncadd [#allocation7], %s1438
      %s1441 = sshll.u32 [#allocation10], 4
      %s1442 = int_to_ptr.vmem [resolvable:$true] %s1441
      %1444 = dma.vmem_to_hbm [thread:$0]  %s1442, 64, %s2, [#allocation7]
    $region29: #{tpu_custom_call.1} parent=1 // pred_fallthru
      _
    // Predicated region
    $region30: #{tpu_custom_call.1} parent=1 // pred_check
      _
    $region31: #{tpu_custom_call.1} parent=1 // pred_check_branch
      %1446 = sbr.rel (0) target = $region33
    $region32: #{tpu_custom_call.1} parent=1 // pred_region
      %1447 = dma.done [#allocation7], 64
    $region33: #{tpu_custom_call.1} parent=1 // pred_fallthru
      _
    %1448 = vsyncpa [#allocation6], 1
    %1449 = vsyncpa [#allocation9], 1
    %1450 = vsyncpa [#allocation7], 1

</llo_original>
